<compile_context>
chip_gen: v7x
topology: tpu7x:2x2x1
jax: 0.10.0
libtpu: 0.0.40
codegen_flags: <defaults>
</compile_context>

<pallas_src>
import functools

import jax
import jax.numpy as jnp
from jax import lax
from jax.experimental import pallas as pl
from jax.experimental.pallas import tpu as pltpu


def _round_up(x, m):
    return (x + m - 1) // m * m


def _gate_block_pad_cols(w, h, hp):
    """(rows, 4*h) -> (rows, 4*hp): pad each PyTorch gate block (i,f,g,o) to hp cols."""
    rows = w.shape[0]
    w4 = w.reshape(rows, 4, h)
    return jnp.pad(w4, ((0, 0), (0, 0), (0, hp - h))).reshape(rows, 4 * hp)


def _lstm_recurrence_kernel(xg_ref, h0_ref, c0_ref, whh_ref,
                            h_out_ref, c_out_ref, *,
                            hp, tc, t_total, mask_tail, unroll):
    """One grid step == one chunk of `tc` timesteps of the LSTM recurrence.

    xg_ref : (tc, Bp, 4*Hp) f32  precomputed x[t] @ W_ih^T + bias (gate-blocked)
    h0/c0  : (Bp, Hp) f32        initial hidden / cell state
    whh_ref: (Hp, 4*Hp)          recurrent weights, gate-blocked (f32 or bf16)
    h_out/c_out: (Bp, Hp) f32    VMEM-resident recurrent state == final outputs
    """
    chunk = pl.program_id(0)

    @pl.when(chunk == 0)
    def _():
        h_out_ref[...] = h0_ref[...]
        c_out_ref[...] = c0_ref[...]

    whh = whh_ref[...]  # loop-invariant; load once per chunk

    def step(i, carry):
        h, c = carry
        # Serial-path work per step: one (Bp, Hp) x (Hp, 4*Hp) MXU matmul + VPU/EUP gates.
        gates = xg_ref[i] + jnp.dot(h.astype(whh.dtype), whh,
                                    preferred_element_type=jnp.float32)
        i_g = jax.nn.sigmoid(gates[:, 0 * hp:1 * hp])   # lane-aligned slices (hp % 128 == 0)
        f_g = jax.nn.sigmoid(gates[:, 1 * hp:2 * hp])
        g_g = jnp.tanh(gates[:, 2 * hp:3 * hp])
        o_g = jax.nn.sigmoid(gates[:, 3 * hp:4 * hp])
        c_new = f_g * c + i_g * g_g
        h_new = o_g * jnp.tanh(c_new)
        if mask_tail:  # only emitted when T is not a multiple of tc
            valid = (chunk * tc + i) < t_total
            h_new = jnp.where(valid, h_new, h)
            c_new = jnp.where(valid, c_new, c)
        return h_new, c_new

    h, c = lax.fori_loop(0, tc, step, (h_out_ref[...], c_out_ref[...]),
                         unroll=unroll)
    h_out_ref[...] = h
    c_out_ref[...] = c


def encoder_lstm_forward(x, hidden, w_ih, w_hh, b_ih, b_hh, *,
                         param_dtype=jnp.float32,
                         max_chunk_timesteps=64):
    """Pallas equivalent of EncoderLSTM.forward(input, hidden) -> (h_n, c_n).

    x:      (T, B, I)
    hidden: tuple (h0, c0), each (1, B, H)
    w_ih:   (4H, I), w_hh: (4H, H), b_ih/b_hh: (4H,)   (PyTorch layout, gate order i,f,g,o)
    param_dtype: dtype for matmul operands (jnp.float32 or jnp.bfloat16);
                 accumulation and cell-state math stay float32.
    returns (h_n, c_n), each (1, B, H) float32
    """
    h0, c0 = hidden
    T, B, I = x.shape
    H = h0.shape[-1]

    Bp = max(_round_up(B, 8), 8)        # sublane-dense batch
    Hp = max(_round_up(H, 128), 128)    # lane-dense hidden (gate blocks lane-aligned)

    xf = jnp.asarray(x, jnp.float32)
    wih_t = jnp.asarray(w_ih, jnp.float32).T          # (I, 4H)
    whh_t = jnp.asarray(w_hh, jnp.float32).T          # (H, 4H)
    bias = jnp.asarray(b_ih, jnp.float32) + jnp.asarray(b_hh, jnp.float32)

    # Gate-blocked, lane-aligned padded parameters. Padded columns/rows are ZERO so
    # sigmoid(0)=0.5 / tanh(0)=0 in padded gate lanes keeps padded state exactly 0
    # and never feeds back into real columns.
    wih_p = _gate_block_pad_cols(wih_t, H, Hp)                        # (I, 4*Hp)
    whh_p = _gate_block_pad_cols(whh_t, H, Hp)                        # (H, 4*Hp)
    whh_p = jnp.pad(whh_p, ((0, Hp - H), (0, 0)))                     # (Hp, 4*Hp)
    bias_p = _gate_block_pad_cols(bias.reshape(1, 4 * H), H, Hp)      # (1, 4*Hp)

    # --- (1) Hoist the input projection off the serial path: one big matmul for all T.
    x_p = jnp.pad(xf, ((0, 0), (0, Bp - B), (0, 0)))                  # (T, Bp, I)
    xg = jnp.dot(x_p.reshape(T * Bp, I).astype(param_dtype),
                 wih_p.astype(param_dtype),
                 preferred_element_type=jnp.float32)
    xg = (xg + bias_p).reshape(T, Bp, 4 * Hp)                         # f32 pre-activations

    # --- (2) Chunk timesteps so per-grid-step overhead amortizes; keep xg chunk <= ~8 MiB.
    tc_cap = max(1, (8 * 1024 * 1024) // (Bp * 4 * Hp * 4))
    tc = int(min(T, max_chunk_timesteps, tc_cap))
    n_chunks = (T + tc - 1) // tc
    T_pad = n_chunks * tc
    if T_pad != T:
        xg = jnp.pad(xg, ((0, T_pad - T), (0, 0), (0, 0)))

    h0_p = jnp.pad(jnp.asarray(h0, jnp.float32).reshape(B, H),
                   ((0, Bp - B), (0, Hp - H)))
    c0_p = jnp.pad(jnp.asarray(c0, jnp.float32).reshape(B, H),
                   ((0, Bp - B), (0, Hp - H)))
    whh_k = whh_p.astype(param_dtype)

    kernel = functools.partial(
        _lstm_recurrence_kernel, hp=Hp, tc=tc, t_total=T,
        mask_tail=(T_pad != T), unroll=True if tc <= 8 else 8)

    # VMEM budget: double-buffered xg chunk + single-copy weights + state blocks.
    est = (2 * tc * Bp * 4 * Hp * 4
           + Hp * 4 * Hp * jnp.dtype(param_dtype).itemsize
           + 6 * Bp * Hp * 4)
    vmem_limit = int(min(max(2 * est, 16 * 1024 * 1024), 48 * 1024 * 1024))

    h_n, c_n = pl.pallas_call(
        kernel,
        out_shape=(jax.ShapeDtypeStruct((Bp, Hp), jnp.float32),
                   jax.ShapeDtypeStruct((Bp, Hp), jnp.float32)),
        grid_spec=pltpu.PrefetchScalarGridSpec(
            num_scalar_prefetch=0,
            grid=(n_chunks,),
            in_specs=[
                pl.BlockSpec((tc, Bp, 4 * Hp), lambda c: (c, 0, 0)),   # xg chunk
                pl.BlockSpec((Bp, Hp), lambda c: (0, 0)),              # h0 (invariant)
                pl.BlockSpec((Bp, Hp), lambda c: (0, 0)),              # c0 (invariant)
                pl.BlockSpec((Hp, 4 * Hp), lambda c: (0, 0)),          # W_hh^T (invariant)
            ],
            out_specs=[
                pl.BlockSpec((Bp, Hp), lambda c: (0, 0)),              # h_n (resident state)
                pl.BlockSpec((Bp, Hp), lambda c: (0, 0)),              # c_n (resident state)
            ],
        ),
        compiler_params=pltpu.CompilerParams(
            dimension_semantics=("arbitrary",),       # sequential recurrence
            vmem_limit_bytes=vmem_limit,
        ),
    )(xg, h0_p, c0_p, whh_k)

    return h_n[:B, :H].reshape(1, B, H), c_n[:B, :H].reshape(1, B, H)


def _reference_lstm(x, hidden, w_ih, w_hh, b_ih, b_hh):
    """Pure-JAX reference (matches PyTorch nn.LSTM single-layer forward)."""
    h0, c0 = hidden
    H = h0.shape[2]

    def step(carry, x_t):
        h, c = carry
        gates = x_t @ w_ih.T + h @ w_hh.T + b_ih + b_hh
        i = jax.nn.sigmoid(gates[:, 0 * H:1 * H])
        f = jax.nn.sigmoid(gates[:, 1 * H:2 * H])
        g = jnp.tanh(gates[:, 2 * H:3 * H])
        o = jax.nn.sigmoid(gates[:, 3 * H:4 * H])
        c = f * c + i * g
        h = o * jnp.tanh(c)
        return (h, c), None

    (h_n, c_n), _ = lax.scan(step, (h0[0], c0[0]), x)
    return h_n[None], c_n[None]


if __name__ == "__main__":
    # Small shapes consistent with EncoderLSTM: seq=8, batch=2, input_size=16, hidden=32.
    T, B, I, H = 8, 2, 16, 32

    key = jax.random.PRNGKey(0)
    k_x, k_wih, k_whh, k_bih, k_bhh = jax.random.split(key, 5)

    # Deterministic parameter init (PyTorch LSTM default: U(-1/sqrt(H), 1/sqrt(H))).
    bound = 1.0 / jnp.sqrt(jnp.float32(H))
    w_ih = jax.random.uniform(k_wih, (4 * H, I), jnp.float32, -bound, bound)
    w_hh = jax.random.uniform(k_whh, (4 * H, H), jnp.float32, -bound, bound)
    b_ih = jax.random.uniform(k_bih, (4 * H,), jnp.float32, -bound, bound)
    b_hh = jax.random.uniform(k_bhh, (4 * H,), jnp.float32, -bound, bound)

    x = jax.random.normal(k_x, (T, B, I), jnp.float32)
    # initHidden: zeros of shape (1, batch, hidden) for both h0 and c0.
    h0 = jnp.zeros((1, B, H), jnp.float32)
    c0 = jnp.zeros((1, B, H), jnp.float32)

    h_ref, c_ref = _reference_lstm(x, (h0, c0), w_ih, w_hh, b_ih, b_hh)

    # f32 matmul operands: tight check against the reference.
    h_n, c_n = encoder_lstm_forward(x, (h0, c0), w_ih, w_hh, b_ih, b_hh,
                                    param_dtype=jnp.float32)
    jax.block_until_ready((h_n, c_n))
    assert h_n.shape == (1, B, H) and c_n.shape == (1, B, H)
    assert jnp.allclose(h_n, h_ref, atol=1e-5, rtol=1e-5)
    assert jnp.allclose(c_n, c_ref, atol=1e-5, rtol=1e-5)

    # bf16 matmul operands (production setting for large H): looser check.
    h_bf, c_bf = encoder_lstm_forward(x, (h0, c0), w_ih, w_hh, b_ih, b_hh,
                                      param_dtype=jnp.bfloat16)
    jax.block_until_ready((h_bf, c_bf))
    assert jnp.allclose(h_bf, h_ref, atol=2e-2, rtol=2e-2)
    assert jnp.allclose(c_bf, c_ref, atol=2e-2, rtol=2e-2)

    print("KERNEL_OK")
</pallas_src>

<mosaic_0001>
module attributes {stable_mosaic.version = 11 : i64} {
  func.func @_lstm_recurrence_kernel(%arg0: i32, %arg1: memref<8x8x512xf32, #tpu.memory_space<vmem>>, %arg2: memref<8x128xf32, #tpu.memory_space<vmem>>, %arg3: memref<8x128xf32, #tpu.memory_space<vmem>>, %arg4: memref<128x512xf32, #tpu.memory_space<vmem>>, %arg5: memref<8x128xf32, #tpu.memory_space<vmem>>, %arg6: memref<8x128xf32, #tpu.memory_space<vmem>>) attributes {dimension_semantics = [#tpu.dimension_semantics<arbitrary>], iteration_bounds = array<i64: 1>, scalar_prefetch = 0 : i64, scratch_operands = 0 : i64, tpu.core_type = #tpu.core_type<tc>, window_params = [{transform_indices = @transform_0, window_bounds = array<i64: 8, 8, 512>}, {pipeline_mode = #tpu.pipeline_mode<synchronous>, transform_indices = @transform_1, window_bounds = array<i64: 8, 128>}, {pipeline_mode = #tpu.pipeline_mode<synchronous>, transform_indices = @transform_2, window_bounds = array<i64: 8, 128>}, {pipeline_mode = #tpu.pipeline_mode<synchronous>, transform_indices = @transform_3, window_bounds = array<i64: 128, 512>}, {pipeline_mode = #tpu.pipeline_mode<synchronous>, transform_indices = @transform_4, window_bounds = array<i64: 8, 128>}, {pipeline_mode = #tpu.pipeline_mode<synchronous>, transform_indices = @transform_5, window_bounds = array<i64: 8, 128>}]} {
    %c0_i32 = arith.constant 0 : i32
    %0 = arith.cmpi eq, %arg0, %c0_i32 : i32
    %1 = arith.extui %0 : i1 to i32
    %c0_i32_0 = arith.constant 0 : i32
    %2 = arith.cmpi ne, %1, %c0_i32_0 : i32
    scf.if %2 {
      %c0_58 = arith.constant 0 : index
      %c0_59 = arith.constant 0 : index
      %248 = vector.load %arg2[%c0_58, %c0_59] : memref<8x128xf32, #tpu.memory_space<vmem>>, vector<8x128xf32>
      %c0_60 = arith.constant 0 : index
      %c0_61 = arith.constant 0 : index
      %249 = vector.load %arg5[%c0_60, %c0_61] : memref<8x128xf32, #tpu.memory_space<vmem>>, vector<8x128xf32>
      tpu.vector_store %arg5[%c0_60, %c0_61], %248 {strides = array<i32>} : memref<8x128xf32, #tpu.memory_space<vmem>>, vector<8x128xf32>,
      %c0_62 = arith.constant 0 : index
      %c0_63 = arith.constant 0 : index
      %250 = vector.load %arg3[%c0_62, %c0_63] : memref<8x128xf32, #tpu.memory_space<vmem>>, vector<8x128xf32>
      %c0_64 = arith.constant 0 : index
      %c0_65 = arith.constant 0 : index
      %251 = vector.load %arg6[%c0_64, %c0_65] : memref<8x128xf32, #tpu.memory_space<vmem>>, vector<8x128xf32>
      tpu.vector_store %arg6[%c0_64, %c0_65], %250 {strides = array<i32>} : memref<8x128xf32, #tpu.memory_space<vmem>>, vector<8x128xf32>,
    } else {
    }
    %c0 = arith.constant 0 : index
    %c0_1 = arith.constant 0 : index
    %3 = vector.load %arg4[%c0, %c0_1] : memref<128x512xf32, #tpu.memory_space<vmem>>, vector<128x512xf32>
    %c0_2 = arith.constant 0 : index
    %c0_3 = arith.constant 0 : index
    %4 = vector.load %arg5[%c0_2, %c0_3] : memref<8x128xf32, #tpu.memory_space<vmem>>, vector<8x128xf32>
    %c0_4 = arith.constant 0 : index
    %c0_5 = arith.constant 0 : index
    %5 = vector.load %arg6[%c0_4, %c0_5] : memref<8x128xf32, #tpu.memory_space<vmem>>, vector<8x128xf32>
    %c0_i32_6 = arith.constant 0 : i32
    %6 = arith.index_cast %c0_i32_6 : i32 to index
    %c0_7 = arith.constant 0 : index
    %c0_8 = arith.constant 0 : index
    %7 = vector.load %arg1[%6, %c0_7, %c0_8] : memref<8x8x512xf32, #tpu.memory_space<vmem>>, vector<1x8x512xf32>
    %8 = vector.shape_cast %7 : vector<1x8x512xf32> to vector<8x512xf32>
    %cst = arith.constant dense<0.000000e+00> : vector<8x512xf32>
    %9 = tpu.matmul %4, %3, %cst {dimension_numbers = #tpu.dot_dimension_numbers<[1], [0], [0], [1], [0, 0, 1, 1], [], []>} : vector<8x128xf32>, vector<128x512xf32>, vector<8x512xf32> -> vector<8x512xf32>
    %10 = arith.addf %8, %9 : vector<8x512xf32>
    %11 = vector.extract_strided_slice %10 {offsets = [0, 0], sizes = [8, 128], strides = [1, 1]} : vector<8x512xf32> to vector<8x128xf32>
    %12 = arith.negf %11 : vector<8x128xf32>
    %13 = math.exp %12 : vector<8x128xf32>
    %cst_9 = arith.constant 1.000000e+00 : f32
    %14 = vector.broadcast %cst_9 : f32 to vector<8x128xf32>
    %15 = arith.addf %14, %13 : vector<8x128xf32>
    %16 = arith.divf %14, %15 : vector<8x128xf32>
    %17 = vector.extract_strided_slice %10 {offsets = [0, 128], sizes = [8, 128], strides = [1, 1]} : vector<8x512xf32> to vector<8x128xf32>
    %18 = arith.negf %17 : vector<8x128xf32>
    %19 = math.exp %18 : vector<8x128xf32>
    %cst_10 = arith.constant 1.000000e+00 : f32
    %20 = vector.broadcast %cst_10 : f32 to vector<8x128xf32>
    %21 = arith.addf %20, %19 : vector<8x128xf32>
    %22 = arith.divf %20, %21 : vector<8x128xf32>
    %23 = vector.extract_strided_slice %10 {offsets = [0, 256], sizes = [8, 128], strides = [1, 1]} : vector<8x512xf32> to vector<8x128xf32>
    %24 = math.tanh %23 : vector<8x128xf32>
    %25 = vector.extract_strided_slice %10 {offsets = [0, 384], sizes = [8, 128], strides = [1, 1]} : vector<8x512xf32> to vector<8x128xf32>
    %26 = arith.negf %25 : vector<8x128xf32>
    %27 = math.exp %26 : vector<8x128xf32>
    %cst_11 = arith.constant 1.000000e+00 : f32
    %28 = vector.broadcast %cst_11 : f32 to vector<8x128xf32>
    %29 = arith.addf %28, %27 : vector<8x128xf32>
    %30 = arith.divf %28, %29 : vector<8x128xf32>
    %31 = arith.mulf %22, %5 : vector<8x128xf32>
    %32 = arith.mulf %16, %24 : vector<8x128xf32>
    %33 = arith.addf %31, %32 : vector<8x128xf32>
    %34 = math.tanh %33 : vector<8x128xf32>
    %35 = arith.mulf %30, %34 : vector<8x128xf32>
    %c1_i32 = arith.constant 1 : i32
    %36 = arith.index_cast %c1_i32 : i32 to index
    %c0_12 = arith.constant 0 : index
    %c0_13 = arith.constant 0 : index
    %37 = vector.load %arg1[%36, %c0_12, %c0_13] : memref<8x8x512xf32, #tpu.memory_space<vmem>>, vector<1x8x512xf32>
    %38 = vector.shape_cast %37 : vector<1x8x512xf32> to vector<8x512xf32>
    %cst_14 = arith.constant dense<0.000000e+00> : vector<8x512xf32>
    %39 = tpu.matmul %35, %3, %cst_14 {dimension_numbers = #tpu.dot_dimension_numbers<[1], [0], [0], [1], [0, 0, 1, 1], [], []>} : vector<8x128xf32>, vector<128x512xf32>, vector<8x512xf32> -> vector<8x512xf32>
    %40 = arith.addf %38, %39 : vector<8x512xf32>
    %41 = vector.extract_strided_slice %40 {offsets = [0, 0], sizes = [8, 128], strides = [1, 1]} : vector<8x512xf32> to vector<8x128xf32>
    %42 = arith.negf %41 : vector<8x128xf32>
    %43 = math.exp %42 : vector<8x128xf32>
    %cst_15 = arith.constant 1.000000e+00 : f32
    %44 = vector.broadcast %cst_15 : f32 to vector<8x128xf32>
    %45 = arith.addf %44, %43 : vector<8x128xf32>
    %46 = arith.divf %44, %45 : vector<8x128xf32>
    %47 = vector.extract_strided_slice %40 {offsets = [0, 128], sizes = [8, 128], strides = [1, 1]} : vector<8x512xf32> to vector<8x128xf32>
    %48 = arith.negf %47 : vector<8x128xf32>
    %49 = math.exp %48 : vector<8x128xf32>
    %cst_16 = arith.constant 1.000000e+00 : f32
    %50 = vector.broadcast %cst_16 : f32 to vector<8x128xf32>
    %51 = arith.addf %50, %49 : vector<8x128xf32>
    %52 = arith.divf %50, %51 : vector<8x128xf32>
    %53 = vector.extract_strided_slice %40 {offsets = [0, 256], sizes = [8, 128], strides = [1, 1]} : vector<8x512xf32> to vector<8x128xf32>
    %54 = math.tanh %53 : vector<8x128xf32>
    %55 = vector.extract_strided_slice %40 {offsets = [0, 384], sizes = [8, 128], strides = [1, 1]} : vector<8x512xf32> to vector<8x128xf32>
    %56 = arith.negf %55 : vector<8x128xf32>
    %57 = math.exp %56 : vector<8x128xf32>
    %cst_17 = arith.constant 1.000000e+00 : f32
    %58 = vector.broadcast %cst_17 : f32 to vector<8x128xf32>
    %59 = arith.addf %58, %57 : vector<8x128xf32>
    %60 = arith.divf %58, %59 : vector<8x128xf32>
    %61 = arith.mulf %52, %33 : vector<8x128xf32>
    %62 = arith.mulf %46, %54 : vector<8x128xf32>
    %63 = arith.addf %61, %62 : vector<8x128xf32>
    %64 = math.tanh %63 : vector<8x128xf32>
    %65 = arith.mulf %60, %64 : vector<8x128xf32>
    %c2_i32 = arith.constant 2 : i32
    %66 = arith.index_cast %c2_i32 : i32 to index
    %c0_18 = arith.constant 0 : index
    %c0_19 = arith.constant 0 : index
    %67 = vector.load %arg1[%66, %c0_18, %c0_19] : memref<8x8x512xf32, #tpu.memory_space<vmem>>, vector<1x8x512xf32>
    %68 = vector.shape_cast %67 : vector<1x8x512xf32> to vector<8x512xf32>
    %cst_20 = arith.constant dense<0.000000e+00> : vector<8x512xf32>
    %69 = tpu.matmul %65, %3, %cst_20 {dimension_numbers = #tpu.dot_dimension_numbers<[1], [0], [0], [1], [0, 0, 1, 1], [], []>} : vector<8x128xf32>, vector<128x512xf32>, vector<8x512xf32> -> vector<8x512xf32>
    %70 = arith.addf %68, %69 : vector<8x512xf32>
    %71 = vector.extract_strided_slice %70 {offsets = [0, 0], sizes = [8, 128], strides = [1, 1]} : vector<8x512xf32> to vector<8x128xf32>
    %72 = arith.negf %71 : vector<8x128xf32>
    %73 = math.exp %72 : vector<8x128xf32>
    %cst_21 = arith.constant 1.000000e+00 : f32
    %74 = vector.broadcast %cst_21 : f32 to vector<8x128xf32>
    %75 = arith.addf %74, %73 : vector<8x128xf32>
    %76 = arith.divf %74, %75 : vector<8x128xf32>
    %77 = vector.extract_strided_slice %70 {offsets = [0, 128], sizes = [8, 128], strides = [1, 1]} : vector<8x512xf32> to vector<8x128xf32>
    %78 = arith.negf %77 : vector<8x128xf32>
    %79 = math.exp %78 : vector<8x128xf32>
    %cst_22 = arith.constant 1.000000e+00 : f32
    %80 = vector.broadcast %cst_22 : f32 to vector<8x128xf32>
    %81 = arith.addf %80, %79 : vector<8x128xf32>
    %82 = arith.divf %80, %81 : vector<8x128xf32>
    %83 = vector.extract_strided_slice %70 {offsets = [0, 256], sizes = [8, 128], strides = [1, 1]} : vector<8x512xf32> to vector<8x128xf32>
    %84 = math.tanh %83 : vector<8x128xf32>
    %85 = vector.extract_strided_slice %70 {offsets = [0, 384], sizes = [8, 128], strides = [1, 1]} : vector<8x512xf32> to vector<8x128xf32>
    %86 = arith.negf %85 : vector<8x128xf32>
    %87 = math.exp %86 : vector<8x128xf32>
    %cst_23 = arith.constant 1.000000e+00 : f32
    %88 = vector.broadcast %cst_23 : f32 to vector<8x128xf32>
    %89 = arith.addf %88, %87 : vector<8x128xf32>
    %90 = arith.divf %88, %89 : vector<8x128xf32>
    %91 = arith.mulf %82, %63 : vector<8x128xf32>
    %92 = arith.mulf %76, %84 : vector<8x128xf32>
    %93 = arith.addf %91, %92 : vector<8x128xf32>
    %94 = math.tanh %93 : vector<8x128xf32>
    %95 = arith.mulf %90, %94 : vector<8x128xf32>
    %c3_i32 = arith.constant 3 : i32
    %96 = arith.index_cast %c3_i32 : i32 to index
    %c0_24 = arith.constant 0 : index
    %c0_25 = arith.constant 0 : index
    %97 = vector.load %arg1[%96, %c0_24, %c0_25] : memref<8x8x512xf32, #tpu.memory_space<vmem>>, vector<1x8x512xf32>
    %98 = vector.shape_cast %97 : vector<1x8x512xf32> to vector<8x512xf32>
    %cst_26 = arith.constant dense<0.000000e+00> : vector<8x512xf32>
    %99 = tpu.matmul %95, %3, %cst_26 {dimension_numbers = #tpu.dot_dimension_numbers<[1], [0], [0], [1], [0, 0, 1, 1], [], []>} : vector<8x128xf32>, vector<128x512xf32>, vector<8x512xf32> -> vector<8x512xf32>
    %100 = arith.addf %98, %99 : vector<8x512xf32>
    %101 = vector.extract_strided_slice %100 {offsets = [0, 0], sizes = [8, 128], strides = [1, 1]} : vector<8x512xf32> to vector<8x128xf32>
    %102 = arith.negf %101 : vector<8x128xf32>
    %103 = math.exp %102 : vector<8x128xf32>
    %cst_27 = arith.constant 1.000000e+00 : f32
    %104 = vector.broadcast %cst_27 : f32 to vector<8x128xf32>
    %105 = arith.addf %104, %103 : vector<8x128xf32>
    %106 = arith.divf %104, %105 : vector<8x128xf32>
    %107 = vector.extract_strided_slice %100 {offsets = [0, 128], sizes = [8, 128], strides = [1, 1]} : vector<8x512xf32> to vector<8x128xf32>
    %108 = arith.negf %107 : vector<8x128xf32>
    %109 = math.exp %108 : vector<8x128xf32>
    %cst_28 = arith.constant 1.000000e+00 : f32
    %110 = vector.broadcast %cst_28 : f32 to vector<8x128xf32>
    %111 = arith.addf %110, %109 : vector<8x128xf32>
    %112 = arith.divf %110, %111 : vector<8x128xf32>
    %113 = vector.extract_strided_slice %100 {offsets = [0, 256], sizes = [8, 128], strides = [1, 1]} : vector<8x512xf32> to vector<8x128xf32>
    %114 = math.tanh %113 : vector<8x128xf32>
    %115 = vector.extract_strided_slice %100 {offsets = [0, 384], sizes = [8, 128], strides = [1, 1]} : vector<8x512xf32> to vector<8x128xf32>
    %116 = arith.negf %115 : vector<8x128xf32>
    %117 = math.exp %116 : vector<8x128xf32>
    %cst_29 = arith.constant 1.000000e+00 : f32
    %118 = vector.broadcast %cst_29 : f32 to vector<8x128xf32>
    %119 = arith.addf %118, %117 : vector<8x128xf32>
    %120 = arith.divf %118, %119 : vector<8x128xf32>
    %121 = arith.mulf %112, %93 : vector<8x128xf32>
    %122 = arith.mulf %106, %114 : vector<8x128xf32>
    %123 = arith.addf %121, %122 : vector<8x128xf32>
    %124 = math.tanh %123 : vector<8x128xf32>
    %125 = arith.mulf %120, %124 : vector<8x128xf32>
    %c4_i32 = arith.constant 4 : i32
    %126 = arith.index_cast %c4_i32 : i32 to index
    %c0_30 = arith.constant 0 : index
    %c0_31 = arith.constant 0 : index
    %127 = vector.load %arg1[%126, %c0_30, %c0_31] : memref<8x8x512xf32, #tpu.memory_space<vmem>>, vector<1x8x512xf32>
    %128 = vector.shape_cast %127 : vector<1x8x512xf32> to vector<8x512xf32>
    %cst_32 = arith.constant dense<0.000000e+00> : vector<8x512xf32>
    %129 = tpu.matmul %125, %3, %cst_32 {dimension_numbers = #tpu.dot_dimension_numbers<[1], [0], [0], [1], [0, 0, 1, 1], [], []>} : vector<8x128xf32>, vector<128x512xf32>, vector<8x512xf32> -> vector<8x512xf32>
    %130 = arith.addf %128, %129 : vector<8x512xf32>
    %131 = vector.extract_strided_slice %130 {offsets = [0, 0], sizes = [8, 128], strides = [1, 1]} : vector<8x512xf32> to vector<8x128xf32>
    %132 = arith.negf %131 : vector<8x128xf32>
    %133 = math.exp %132 : vector<8x128xf32>
    %cst_33 = arith.constant 1.000000e+00 : f32
    %134 = vector.broadcast %cst_33 : f32 to vector<8x128xf32>
    %135 = arith.addf %134, %133 : vector<8x128xf32>
    %136 = arith.divf %134, %135 : vector<8x128xf32>
    %137 = vector.extract_strided_slice %130 {offsets = [0, 128], sizes = [8, 128], strides = [1, 1]} : vector<8x512xf32> to vector<8x128xf32>
    %138 = arith.negf %137 : vector<8x128xf32>
    %139 = math.exp %138 : vector<8x128xf32>
    %cst_34 = arith.constant 1.000000e+00 : f32
    %140 = vector.broadcast %cst_34 : f32 to vector<8x128xf32>
    %141 = arith.addf %140, %139 : vector<8x128xf32>
    %142 = arith.divf %140, %141 : vector<8x128xf32>
    %143 = vector.extract_strided_slice %130 {offsets = [0, 256], sizes = [8, 128], strides = [1, 1]} : vector<8x512xf32> to vector<8x128xf32>
    %144 = math.tanh %143 : vector<8x128xf32>
    %145 = vector.extract_strided_slice %130 {offsets = [0, 384], sizes = [8, 128], strides = [1, 1]} : vector<8x512xf32> to vector<8x128xf32>
    %146 = arith.negf %145 : vector<8x128xf32>
    %147 = math.exp %146 : vector<8x128xf32>
    %cst_35 = arith.constant 1.000000e+00 : f32
    %148 = vector.broadcast %cst_35 : f32 to vector<8x128xf32>
    %149 = arith.addf %148, %147 : vector<8x128xf32>
    %150 = arith.divf %148, %149 : vector<8x128xf32>
    %151 = arith.mulf %142, %123 : vector<8x128xf32>
    %152 = arith.mulf %136, %144 : vector<8x128xf32>
    %153 = arith.addf %151, %152 : vector<8x128xf32>
    %154 = math.tanh %153 : vector<8x128xf32>
    %155 = arith.mulf %150, %154 : vector<8x128xf32>
    %c5_i32 = arith.constant 5 : i32
    %156 = arith.index_cast %c5_i32 : i32 to index
    %c0_36 = arith.constant 0 : index
    %c0_37 = arith.constant 0 : index
    %157 = vector.load %arg1[%156, %c0_36, %c0_37] : memref<8x8x512xf32, #tpu.memory_space<vmem>>, vector<1x8x512xf32>
    %158 = vector.shape_cast %157 : vector<1x8x512xf32> to vector<8x512xf32>
    %cst_38 = arith.constant dense<0.000000e+00> : vector<8x512xf32>
    %159 = tpu.matmul %155, %3, %cst_38 {dimension_numbers = #tpu.dot_dimension_numbers<[1], [0], [0], [1], [0, 0, 1, 1], [], []>} : vector<8x128xf32>, vector<128x512xf32>, vector<8x512xf32> -> vector<8x512xf32>
    %160 = arith.addf %158, %159 : vector<8x512xf32>
    %161 = vector.extract_strided_slice %160 {offsets = [0, 0], sizes = [8, 128], strides = [1, 1]} : vector<8x512xf32> to vector<8x128xf32>
    %162 = arith.negf %161 : vector<8x128xf32>
    %163 = math.exp %162 : vector<8x128xf32>
    %cst_39 = arith.constant 1.000000e+00 : f32
    %164 = vector.broadcast %cst_39 : f32 to vector<8x128xf32>
    %165 = arith.addf %164, %163 : vector<8x128xf32>
    %166 = arith.divf %164, %165 : vector<8x128xf32>
    %167 = vector.extract_strided_slice %160 {offsets = [0, 128], sizes = [8, 128], strides = [1, 1]} : vector<8x512xf32> to vector<8x128xf32>
    %168 = arith.negf %167 : vector<8x128xf32>
    %169 = math.exp %168 : vector<8x128xf32>
    %cst_40 = arith.constant 1.000000e+00 : f32
    %170 = vector.broadcast %cst_40 : f32 to vector<8x128xf32>
    %171 = arith.addf %170, %169 : vector<8x128xf32>
    %172 = arith.divf %170, %171 : vector<8x128xf32>
    %173 = vector.extract_strided_slice %160 {offsets = [0, 256], sizes = [8, 128], strides = [1, 1]} : vector<8x512xf32> to vector<8x128xf32>
    %174 = math.tanh %173 : vector<8x128xf32>
    %175 = vector.extract_strided_slice %160 {offsets = [0, 384], sizes = [8, 128], strides = [1, 1]} : vector<8x512xf32> to vector<8x128xf32>
    %176 = arith.negf %175 : vector<8x128xf32>
    %177 = math.exp %176 : vector<8x128xf32>
    %cst_41 = arith.constant 1.000000e+00 : f32
    %178 = vector.broadcast %cst_41 : f32 to vector<8x128xf32>
    %179 = arith.addf %178, %177 : vector<8x128xf32>
    %180 = arith.divf %178, %179 : vector<8x128xf32>
    %181 = arith.mulf %172, %153 : vector<8x128xf32>
    %182 = arith.mulf %166, %174 : vector<8x128xf32>
    %183 = arith.addf %181, %182 : vector<8x128xf32>
    %184 = math.tanh %183 : vector<8x128xf32>
    %185 = arith.mulf %180, %184 : vector<8x128xf32>
    %c6_i32 = arith.constant 6 : i32
    %186 = arith.index_cast %c6_i32 : i32 to index
    %c0_42 = arith.constant 0 : index
    %c0_43 = arith.constant 0 : index
    %187 = vector.load %arg1[%186, %c0_42, %c0_43] : memref<8x8x512xf32, #tpu.memory_space<vmem>>, vector<1x8x512xf32>
    %188 = vector.shape_cast %187 : vector<1x8x512xf32> to vector<8x512xf32>
    %cst_44 = arith.constant dense<0.000000e+00> : vector<8x512xf32>
    %189 = tpu.matmul %185, %3, %cst_44 {dimension_numbers = #tpu.dot_dimension_numbers<[1], [0], [0], [1], [0, 0, 1, 1], [], []>} : vector<8x128xf32>, vector<128x512xf32>, vector<8x512xf32> -> vector<8x512xf32>
    %190 = arith.addf %188, %189 : vector<8x512xf32>
    %191 = vector.extract_strided_slice %190 {offsets = [0, 0], sizes = [8, 128], strides = [1, 1]} : vector<8x512xf32> to vector<8x128xf32>
    %192 = arith.negf %191 : vector<8x128xf32>
    %193 = math.exp %192 : vector<8x128xf32>
    %cst_45 = arith.constant 1.000000e+00 : f32
    %194 = vector.broadcast %cst_45 : f32 to vector<8x128xf32>
    %195 = arith.addf %194, %193 : vector<8x128xf32>
    %196 = arith.divf %194, %195 : vector<8x128xf32>
    %197 = vector.extract_strided_slice %190 {offsets = [0, 128], sizes = [8, 128], strides = [1, 1]} : vector<8x512xf32> to vector<8x128xf32>
    %198 = arith.negf %197 : vector<8x128xf32>
    %199 = math.exp %198 : vector<8x128xf32>
    %cst_46 = arith.constant 1.000000e+00 : f32
    %200 = vector.broadcast %cst_46 : f32 to vector<8x128xf32>
    %201 = arith.addf %200, %199 : vector<8x128xf32>
    %202 = arith.divf %200, %201 : vector<8x128xf32>
    %203 = vector.extract_strided_slice %190 {offsets = [0, 256], sizes = [8, 128], strides = [1, 1]} : vector<8x512xf32> to vector<8x128xf32>
    %204 = math.tanh %203 : vector<8x128xf32>
    %205 = vector.extract_strided_slice %190 {offsets = [0, 384], sizes = [8, 128], strides = [1, 1]} : vector<8x512xf32> to vector<8x128xf32>
    %206 = arith.negf %205 : vector<8x128xf32>
    %207 = math.exp %206 : vector<8x128xf32>
    %cst_47 = arith.constant 1.000000e+00 : f32
    %208 = vector.broadcast %cst_47 : f32 to vector<8x128xf32>
    %209 = arith.addf %208, %207 : vector<8x128xf32>
    %210 = arith.divf %208, %209 : vector<8x128xf32>
    %211 = arith.mulf %202, %183 : vector<8x128xf32>
    %212 = arith.mulf %196, %204 : vector<8x128xf32>
    %213 = arith.addf %211, %212 : vector<8x128xf32>
    %214 = math.tanh %213 : vector<8x128xf32>
    %215 = arith.mulf %210, %214 : vector<8x128xf32>
    %c7_i32 = arith.constant 7 : i32
    %216 = arith.index_cast %c7_i32 : i32 to index
    %c0_48 = arith.constant 0 : index
    %c0_49 = arith.constant 0 : index
    %217 = vector.load %arg1[%216, %c0_48, %c0_49] : memref<8x8x512xf32, #tpu.memory_space<vmem>>, vector<1x8x512xf32>
    %218 = vector.shape_cast %217 : vector<1x8x512xf32> to vector<8x512xf32>
    %cst_50 = arith.constant dense<0.000000e+00> : vector<8x512xf32>
    %219 = tpu.matmul %215, %3, %cst_50 {dimension_numbers = #tpu.dot_dimension_numbers<[1], [0], [0], [1], [0, 0, 1, 1], [], []>} : vector<8x128xf32>, vector<128x512xf32>, vector<8x512xf32> -> vector<8x512xf32>
    %220 = arith.addf %218, %219 : vector<8x512xf32>
    %221 = vector.extract_strided_slice %220 {offsets = [0, 0], sizes = [8, 128], strides = [1, 1]} : vector<8x512xf32> to vector<8x128xf32>
    %222 = arith.negf %221 : vector<8x128xf32>
    %223 = math.exp %222 : vector<8x128xf32>
    %cst_51 = arith.constant 1.000000e+00 : f32
    %224 = vector.broadcast %cst_51 : f32 to vector<8x128xf32>
    %225 = arith.addf %224, %223 : vector<8x128xf32>
    %226 = arith.divf %224, %225 : vector<8x128xf32>
    %227 = vector.extract_strided_slice %220 {offsets = [0, 128], sizes = [8, 128], strides = [1, 1]} : vector<8x512xf32> to vector<8x128xf32>
    %228 = arith.negf %227 : vector<8x128xf32>
    %229 = math.exp %228 : vector<8x128xf32>
    %cst_52 = arith.constant 1.000000e+00 : f32
    %230 = vector.broadcast %cst_52 : f32 to vector<8x128xf32>
    %231 = arith.addf %230, %229 : vector<8x128xf32>
    %232 = arith.divf %230, %231 : vector<8x128xf32>
    %233 = vector.extract_strided_slice %220 {offsets = [0, 256], sizes = [8, 128], strides = [1, 1]} : vector<8x512xf32> to vector<8x128xf32>
    %234 = math.tanh %233 : vector<8x128xf32>
    %235 = vector.extract_strided_slice %220 {offsets = [0, 384], sizes = [8, 128], strides = [1, 1]} : vector<8x512xf32> to vector<8x128xf32>
    %236 = arith.negf %235 : vector<8x128xf32>
    %237 = math.exp %236 : vector<8x128xf32>
    %cst_53 = arith.constant 1.000000e+00 : f32
    %238 = vector.broadcast %cst_53 : f32 to vector<8x128xf32>
    %239 = arith.addf %238, %237 : vector<8x128xf32>
    %240 = arith.divf %238, %239 : vector<8x128xf32>
    %241 = arith.mulf %232, %213 : vector<8x128xf32>
    %242 = arith.mulf %226, %234 : vector<8x128xf32>
    %243 = arith.addf %241, %242 : vector<8x128xf32>
    %244 = math.tanh %243 : vector<8x128xf32>
    %245 = arith.mulf %240, %244 : vector<8x128xf32>
    %c8_i32 = arith.constant 8 : i32
    %c0_54 = arith.constant 0 : index
    %c0_55 = arith.constant 0 : index
    %246 = vector.load %arg5[%c0_54, %c0_55] : memref<8x128xf32, #tpu.memory_space<vmem>>, vector<8x128xf32>
    tpu.vector_store %arg5[%c0_54, %c0_55], %245 {strides = array<i32>} : memref<8x128xf32, #tpu.memory_space<vmem>>, vector<8x128xf32>,
    %c0_56 = arith.constant 0 : index
    %c0_57 = arith.constant 0 : index
    %247 = vector.load %arg6[%c0_56, %c0_57] : memref<8x128xf32, #tpu.memory_space<vmem>>, vector<8x128xf32>
    tpu.vector_store %arg6[%c0_56, %c0_57], %243 {strides = array<i32>} : memref<8x128xf32, #tpu.memory_space<vmem>>, vector<8x128xf32>,
    return
  }
  func.func @transform_0(%arg0: i32) -> (i32, i32, i32) {
    %c0_i32 = arith.constant 0 : i32
    %c0_i32_0 = arith.constant 0 : i32
    %c0_i32_1 = arith.constant 0 : i32
    return %arg0, %c0_i32, %c0_i32_0 : i32, i32, i32
  }
  func.func @transform_1(%arg0: i32) -> (i32, i32) {
    %c0_i32 = arith.constant 0 : i32
    %c0_i32_0 = arith.constant 0 : i32
    %c0_i32_1 = arith.constant 0 : i32
    return %c0_i32, %c0_i32_0 : i32, i32
  }
  func.func @transform_2(%arg0: i32) -> (i32, i32) {
    %c0_i32 = arith.constant 0 : i32
    %c0_i32_0 = arith.constant 0 : i32
    %c0_i32_1 = arith.constant 0 : i32
    return %c0_i32, %c0_i32_0 : i32, i32
  }
  func.func @transform_3(%arg0: i32) -> (i32, i32) {
    %c0_i32 = arith.constant 0 : i32
    %c0_i32_0 = arith.constant 0 : i32
    %c0_i32_1 = arith.constant 0 : i32
    return %c0_i32, %c0_i32_0 : i32, i32
  }
  func.func @transform_4(%arg0: i32) -> (i32, i32) {
    %c0_i32 = arith.constant 0 : i32
    %c0_i32_0 = arith.constant 0 : i32
    %c0_i32_1 = arith.constant 0 : i32
    return %c0_i32, %c0_i32_0 : i32, i32
  }
  func.func @transform_5(%arg0: i32) -> (i32, i32) {
    %c0_i32 = arith.constant 0 : i32
    %c0_i32_0 = arith.constant 0 : i32
    %c0_i32_1 = arith.constant 0 : i32
    return %c0_i32, %c0_i32_0 : i32, i32
  }
}

</mosaic_0001>

<llo_original>
// kernel: tpu_custom_call.1
$region0: #{tpu_custom_call.1}
  #allocation0 [shape = 'u32[]', space=smem, size = 0x4, offset = 0x4, fixed_abs, tag = 'smem constant byte address 0x4 - core index']
  #allocation1 [shape = 'u32[144,128]{1,0:T(1,128)}', space=vmem, size = 0x12000, scoped, tag = 'internal scratch']
  %s0 = inlined_call_operand.hbm [shape: f32[8,8,512], index: 0, kind: input, shape index: {}]
  %s1 = inlined_call_operand.hbm [shape: f32[8,128], index: 1, kind: input, shape index: {}]
  %s2 = inlined_call_operand.hbm [shape: f32[8,128], index: 2, kind: input, shape index: {}]
  %s3 = inlined_call_operand.hbm [shape: f32[128,512], index: 3, kind: input, shape index: {}]
  %s4 = inlined_call_operand.hbm [shape: f32[8,128], index: 4, kind: output, shape index: {0}]
  %s5 = inlined_call_operand.hbm [shape: f32[8,128], index: 5, kind: output, shape index: {1}]
  %6 = xla_tuple %s4, %s5
  %s7 = sld [smem:[#allocation0]]
  $region54: #{tpu_custom_call.1} parent=0
    _
  %s9 = ssub.s32 1, %s7
  %s10 = scalar_select 0, %s9, %s7
  $region1: #{tpu_custom_call.1} parent=0
    #allocation2 [shape = 'u8[131072]{0}', space=vmem, size = 0x20000, scoped, tag = 'input window, operand 0, single buffered']
    #allocation3 [shape = 's32[1]{0}', space=sflag, size = 0x4, scoped, tag = 'scoped memory for tpu_custom_call.1']
    #allocation4 [shape = 's32[1]{0}', space=sflag, size = 0x4, scoped, tag = 'scoped memory for tpu_custom_call.1']
    #allocation5 [shape = 'u8[4096]{0}', space=vmem, size = 0x1000, scoped, tag = 'input window, operand 1, single buffered']
    #allocation6 [shape = 's32[1]{0}', space=sflag, size = 0x4, scoped, tag = 'scoped memory for tpu_custom_call.1']
    #allocation7 [shape = 'u8[4096]{0}', space=vmem, size = 0x1000, scoped, tag = 'input window, operand 2, single buffered']
    #allocation8 [shape = 'u8[262144]{0}', space=vmem, size = 0x40000, scoped, tag = 'input window, operand 3, single buffered']
    #allocation9 [shape = 's32[1]{0}', space=sflag, size = 0x4, scoped, tag = 'scoped memory for tpu_custom_call.1']
    #allocation10 [shape = 'u8[4096]{0}', space=vmem, size = 0x1000, scoped, tag = 'output window, operand 0, single buffered']
    #allocation11 [shape = 'u8[4096]{0}', space=vmem, size = 0x1000, scoped, tag = 'output window, operand 1, single buffered']
    #allocation12 [shape = 's32[1]{0}', space=sflag, size = 0x4, scoped, tag = 'scoped memory for tpu_custom_call.1']
    %11 = vsyncpa [#allocation3], 0
    %12 = vsyncpa [#allocation6], 0
    %13 = vsyncpa [#allocation9], 0
    %14 = vsyncpa [#allocation4], 0
    %15 = vsyncpa [#allocation12], 0
    // Predicated region
    $region2: #{tpu_custom_call.1} parent=1 // pred_check
      _
    $region3: #{tpu_custom_call.1} parent=1 // pred_check_branch
      %17 = sbr.rel (0) target = $region5
    $region4: #{tpu_custom_call.1} parent=1 // pred_region
      %s19 = ssub.s32 4096, 4096
      %20 = vsyncadd [#allocation3], %s19
      %s21 = sshll.u32 [#allocation2], 4
      %s22 = int_to_ptr.vmem [resolvable:$true] %s21
      %27 = dma.hbm_to_vmem [thread:$0]  %s0, 4096, %s22, [#allocation3], 512, 512, 32
    $region5: #{tpu_custom_call.1} parent=1 // pred_fallthru
      _
    // Predicated region
    $region6: #{tpu_custom_call.1} parent=1 // pred_check
      _
    $region7: #{tpu_custom_call.1} parent=1 // pred_check_branch
      %29 = sbr.rel (0) target = $region9
    $region8: #{tpu_custom_call.1} parent=1 // pred_region
      %s31 = ssub.s32 128, 128
      %32 = vsyncadd [#allocation6], %s31
      %s34 = sshll.u32 [#allocation5], 4
      %s35 = int_to_ptr.vmem [resolvable:$true] %s34
      %37 = dma.hbm_to_vmem [thread:$0]  %s1, 128, %s35, [#allocation6]
    $region9: #{tpu_custom_call.1} parent=1 // pred_fallthru
      _
    // Predicated region
    $region10: #{tpu_custom_call.1} parent=1 // pred_check
      _
    $region11: #{tpu_custom_call.1} parent=1 // pred_check_branch
      %39 = sbr.rel (0) target = $region13
    $region12: #{tpu_custom_call.1} parent=1 // pred_region
      %s41 = ssub.s32 128, 128
      %42 = vsyncadd [#allocation6], %s41
      %s44 = sshll.u32 [#allocation7], 4
      %s45 = int_to_ptr.vmem [resolvable:$true] %s44
      %47 = dma.hbm_to_vmem [thread:$0]  %s2, 128, %s45, [#allocation6]
    $region13: #{tpu_custom_call.1} parent=1 // pred_fallthru
      _
    // Predicated region
    $region14: #{tpu_custom_call.1} parent=1 // pred_check
      _
    $region15: #{tpu_custom_call.1} parent=1 // pred_check_branch
      %49 = sbr.rel (0) target = $region17
    $region16: #{tpu_custom_call.1} parent=1 // pred_region
      %s51 = ssub.s32 8192, 8192
      %52 = vsyncadd [#allocation9], %s51
      %s53 = sshll.u32 [#allocation8], 4
      %s54 = int_to_ptr.vmem [resolvable:$true] %s53
      %59 = dma.hbm_to_vmem [thread:$0]  %s3, 8192, %s54, [#allocation9], 512, 512, 32
    $region17: #{tpu_custom_call.1} parent=1 // pred_fallthru
      _
    // Predicated region
    $region18: #{tpu_custom_call.1} parent=1 // pred_check
      _
    $region19: #{tpu_custom_call.1} parent=1 // pred_check_branch
      %61 = sbr.rel (0) target = $region21
    $region20: #{tpu_custom_call.1} parent=1 // pred_region
      %62 = dma.done [#allocation3], 4096
    $region21: #{tpu_custom_call.1} parent=1 // pred_fallthru
      _
    // Predicated region
    $region22: #{tpu_custom_call.1} parent=1 // pred_check
      _
    $region23: #{tpu_custom_call.1} parent=1 // pred_check_branch
      %64 = sbr.rel (0) target = $region25
    $region24: #{tpu_custom_call.1} parent=1 // pred_region
      %65 = dma.done [#allocation6], 128
    $region25: #{tpu_custom_call.1} parent=1 // pred_fallthru
      _
    // Predicated region
    $region26: #{tpu_custom_call.1} parent=1 // pred_check
      _
    $region27: #{tpu_custom_call.1} parent=1 // pred_check_branch
      %67 = sbr.rel (0) target = $region29
    $region28: #{tpu_custom_call.1} parent=1 // pred_region
      %68 = dma.done [#allocation6], 128
    $region29: #{tpu_custom_call.1} parent=1 // pred_fallthru
      _
    // Predicated region
    $region30: #{tpu_custom_call.1} parent=1 // pred_check
      _
    $region31: #{tpu_custom_call.1} parent=1 // pred_check_branch
      %70 = sbr.rel (0) target = $region33
    $region32: #{tpu_custom_call.1} parent=1 // pred_region
      %71 = dma.done [#allocation9], 8192
    $region33: #{tpu_custom_call.1} parent=1 // pred_fallthru
      _
    %p72 = scmp.eq.s32.totalorder 0, 0
    // Predicated region
    $region34: #{tpu_custom_call.1} parent=1 // pred_check
      %p73 = pneg %p72
    $region35: #{tpu_custom_call.1} parent=1 // pred_check_branch
      %75 = sbr.rel (%p73) target = $region37
    $region36: #{tpu_custom_call.1} parent=1 // pred_region
      %v76 = vld [vmem:[#allocation5] sm:$0xff]
      %77 = vst [vmem:[#allocation10] sm:$0xff] %v76
      %v78 = vld [vmem:[#allocation7] sm:$0xff]
      %79 = vst [vmem:[#allocation11] sm:$0xff] %v78
    $region37: #{tpu_custom_call.1} parent=1 // pred_fallthru
      _
    %v80 = vld [vmem:[#allocation8] sm:$0xff]
    %v81 = vld [vmem:[#allocation8 + $0x8] sm:$0xff]
    %v82 = vld [vmem:[#allocation8 + $0x10] sm:$0xff]
    %v83 = vld [vmem:[#allocation8 + $0x18] sm:$0xff]
    %v84 = vld [vmem:[#allocation8 + $0x20] sm:$0xff]
    %v85 = vld [vmem:[#allocation8 + $0x28] sm:$0xff]
    %v86 = vld [vmem:[#allocation8 + $0x30] sm:$0xff]
    %v87 = vld [vmem:[#allocation8 + $0x38] sm:$0xff]
    %v88 = vld [vmem:[#allocation8 + $0x40] sm:$0xff]
    %v89 = vld [vmem:[#allocation8 + $0x48] sm:$0xff]
    %v90 = vld [vmem:[#allocation8 + $0x50] sm:$0xff]
    %v91 = vld [vmem:[#allocation8 + $0x58] sm:$0xff]
    %v92 = vld [vmem:[#allocation8 + $0x60] sm:$0xff]
    %v93 = vld [vmem:[#allocation8 + $0x68] sm:$0xff]
    %v94 = vld [vmem:[#allocation8 + $0x70] sm:$0xff]
    %v95 = vld [vmem:[#allocation8 + $0x78] sm:$0xff]
    %v96 = vld [vmem:[#allocation8 + $0x80] sm:$0xff]
    %v97 = vld [vmem:[#allocation8 + $0x88] sm:$0xff]
    %v98 = vld [vmem:[#allocation8 + $0x90] sm:$0xff]
    %v99 = vld [vmem:[#allocation8 + $0x98] sm:$0xff]
    %v100 = vld [vmem:[#allocation8 + $0xa0] sm:$0xff]
    %v101 = vld [vmem:[#allocation8 + $0xa8] sm:$0xff]
    %v102 = vld [vmem:[#allocation8 + $0xb0] sm:$0xff]
    %v103 = vld [vmem:[#allocation8 + $0xb8] sm:$0xff]
    %v104 = vld [vmem:[#allocation8 + $0xc0] sm:$0xff]
    %v105 = vld [vmem:[#allocation8 + $0xc8] sm:$0xff]
    %v106 = vld [vmem:[#allocation8 + $0xd0] sm:$0xff]
    %v107 = vld [vmem:[#allocation8 + $0xd8] sm:$0xff]
    %v108 = vld [vmem:[#allocation8 + $0xe0] sm:$0xff]
    %v109 = vld [vmem:[#allocation8 + $0xe8] sm:$0xff]
    %v110 = vld [vmem:[#allocation8 + $0xf0] sm:$0xff]
    %v111 = vld [vmem:[#allocation8 + $0xf8] sm:$0xff]
    %v112 = vld [vmem:[#allocation8 + $0x100] sm:$0xff]
    %v113 = vld [vmem:[#allocation8 + $0x108] sm:$0xff]
    %v114 = vld [vmem:[#allocation8 + $0x110] sm:$0xff]
    %v115 = vld [vmem:[#allocation8 + $0x118] sm:$0xff]
    %v116 = vld [vmem:[#allocation8 + $0x120] sm:$0xff]
    %v117 = vld [vmem:[#allocation8 + $0x128] sm:$0xff]
    %v118 = vld [vmem:[#allocation8 + $0x130] sm:$0xff]
    %v119 = vld [vmem:[#allocation8 + $0x138] sm:$0xff]
    %v120 = vld [vmem:[#allocation8 + $0x140] sm:$0xff]
    %v121 = vld [vmem:[#allocation8 + $0x148] sm:$0xff]
    %v122 = vld [vmem:[#allocation8 + $0x150] sm:$0xff]
    %v123 = vld [vmem:[#allocation8 + $0x158] sm:$0xff]
    %v124 = vld [vmem:[#allocation8 + $0x160] sm:$0xff]
    %v125 = vld [vmem:[#allocation8 + $0x168] sm:$0xff]
    %v126 = vld [vmem:[#allocation8 + $0x170] sm:$0xff]
    %v127 = vld [vmem:[#allocation8 + $0x178] sm:$0xff]
    %v128 = vld [vmem:[#allocation8 + $0x180] sm:$0xff]
    %v129 = vld [vmem:[#allocation8 + $0x188] sm:$0xff]
    %v130 = vld [vmem:[#allocation8 + $0x190] sm:$0xff]
    %v131 = vld [vmem:[#allocation8 + $0x198] sm:$0xff]
    %v132 = vld [vmem:[#allocation8 + $0x1a0] sm:$0xff]
    %v133 = vld [vmem:[#allocation8 + $0x1a8] sm:$0xff]
    %v134 = vld [vmem:[#allocation8 + $0x1b0] sm:$0xff]
    %v135 = vld [vmem:[#allocation8 + $0x1b8] sm:$0xff]
    %v136 = vld [vmem:[#allocation8 + $0x1c0] sm:$0xff]
    %v137 = vld [vmem:[#allocation8 + $0x1c8] sm:$0xff]
    %v138 = vld [vmem:[#allocation8 + $0x1d0] sm:$0xff]
    %v139 = vld [vmem:[#allocation8 + $0x1d8] sm:$0xff]
    %v140 = vld [vmem:[#allocation8 + $0x1e0] sm:$0xff]
    %v141 = vld [vmem:[#allocation8 + $0x1e8] sm:$0xff]
    %v142 = vld [vmem:[#allocation8 + $0x1f0] sm:$0xff]
    %v143 = vld [vmem:[#allocation8 + $0x1f8] sm:$0xff]
    %v144 = vld [vmem:[#allocation10] sm:$0xff]
    %v145 = vld [vmem:[#allocation11] sm:$0xff]
    %v146 = vld [vmem:[#allocation2] sm:$0xff]
    %v147 = vld [vmem:[#allocation2 + $0x8] sm:$0xff]
    %v148 = vld [vmem:[#allocation2 + $0x10] sm:$0xff]
    %v149 = vld [vmem:[#allocation2 + $0x18] sm:$0xff]
    %150 = vmatprep.subr.mxu0 %v81
    %151 = vmatpush1.msra.mxu0 %v80
    %152 = vmatprep.subr.mxu0 %v85
    %153 = vmatpush1.msra.mxu0 %v84
    %154 = vmatprep.subr.mxu0 %v89
    %155 = vmatpush1.msra.mxu0 %v88
    %156 = vmatprep.subr.mxu0 %v93
    %157 = vmatpush1.msra.mxu0 %v92
    %158 = vmatprep.subr.mxu0 %v97
    %159 = vmatpush1.msra.mxu0 %v96
    %160 = vmatprep.subr.mxu0 %v101
    %161 = vmatpush1.msra.mxu0 %v100
    %162 = vmatprep.subr.mxu0 %v105
    %163 = vmatpush1.msra.mxu0 %v104
    %164 = vmatprep.subr.mxu0 %v109
    %165 = vmatpush1.msra.mxu0 %v108
    %166 = vmatprep.subr.mxu0 %v113
    %167 = vmatpush1.msra.mxu0 %v112
    %168 = vmatprep.subr.mxu0 %v117
    %169 = vmatpush1.msra.mxu0 %v116
    %170 = vmatprep.subr.mxu0 %v121
    %171 = vmatpush1.msra.mxu0 %v120
    %172 = vmatprep.subr.mxu0 %v125
    %173 = vmatpush1.msra.mxu0 %v124
    %174 = vmatprep.subr.mxu0 %v129
    %175 = vmatpush1.msra.mxu0 %v128
    %176 = vmatprep.subr.mxu0 %v133
    %177 = vmatpush1.msra.mxu0 %v132
    %178 = vmatprep.subr.mxu0 %v137
    %179 = vmatpush1.msra.mxu0 %v136
    %180 = vmatprep.subr.mxu0 %v141
    %181 = vmatpush1.msra.mxu0 %v140
    %182 = vmatprep.subr.mxu0 0.0
    %183 = vmatpush1.msra.mxu0 0.0
    %184 = vmatprep.subr.mxu0 0.0
    %185 = vmatpush1.msra.mxu0 0.0
    %186 = vmatprep.subr.mxu0 0.0
    %187 = vmatpush1.msra.mxu0 0.0
    %188 = vmatprep.subr.mxu0 0.0
    %189 = vmatpush1.msra.mxu0 0.0
    %190 = vmatprep.subr.mxu0 0.0
    %191 = vmatpush1.msra.mxu0 0.0
    %192 = vmatprep.subr.mxu0 0.0
    %193 = vmatpush1.msra.mxu0 0.0
    %194 = vmatprep.subr.mxu0 0.0
    %195 = vmatpush1.msra.mxu0 0.0
    %196 = vmatprep.subr.mxu0 0.0
    %197 = vmatpush1.msra.mxu0 0.0
    %198 = vmatprep.subr.mxu0 0.0
    %199 = vmatpush1.msra.mxu0 0.0
    %200 = vmatprep.subr.mxu0 0.0
    %201 = vmatpush1.msra.mxu0 0.0
    %202 = vmatprep.subr.mxu0 0.0
    %203 = vmatpush1.msra.mxu0 0.0
    %204 = vmatprep.subr.mxu0 0.0
    %205 = vmatpush1.msra.mxu0 0.0
    %206 = vmatprep.subr.mxu0 0.0
    %207 = vmatpush1.msra.mxu0 0.0
    %208 = vmatprep.subr.mxu0 0.0
    %209 = vmatpush1.msra.mxu0 0.0
    %210 = vmatprep.subr.mxu0 0.0
    %211 = vmatpush1.msra.mxu0 0.0
    %212 = vmatprep.subr.mxu0 0.0
    %213 = vmatpush1.msra.mxu0 0.0
    %214 = vmatprep.mubr.f32.mxu0 0.0
    %215 = vmatmul.mubr.f32.gmra.mrb[0].mxu0 %v144
    %v216 = vpop.f32.mrb[0].mxu0
    %v217 = vadd.f32 0.0, %v216
    %v218 = vpop.f32.mrb[0].mxu0
    %v219 = vadd.f32 0.0, %v218
    %220 = vdwg.mxu0
    %221 = vmatprep.subr.mxu0 %v83
    %222 = vmatpush1.msra.mxu0 %v82
    %223 = vmatprep.subr.mxu0 %v87
    %224 = vmatpush1.msra.mxu0 %v86
    %225 = vmatprep.subr.mxu0 %v91
    %226 = vmatpush1.msra.mxu0 %v90
    %227 = vmatprep.subr.mxu0 %v95
    %228 = vmatpush1.msra.mxu0 %v94
    %229 = vmatprep.subr.mxu0 %v99
    %230 = vmatpush1.msra.mxu0 %v98
    %231 = vmatprep.subr.mxu0 %v103
    %232 = vmatpush1.msra.mxu0 %v102
    %233 = vmatprep.subr.mxu0 %v107
    %234 = vmatpush1.msra.mxu0 %v106
    %235 = vmatprep.subr.mxu0 %v111
    %236 = vmatpush1.msra.mxu0 %v110
    %237 = vmatprep.subr.mxu0 %v115
    %238 = vmatpush1.msra.mxu0 %v114
    %239 = vmatprep.subr.mxu0 %v119
    %240 = vmatpush1.msra.mxu0 %v118
    %241 = vmatprep.subr.mxu0 %v123
    %242 = vmatpush1.msra.mxu0 %v122
    %243 = vmatprep.subr.mxu0 %v127
    %244 = vmatpush1.msra.mxu0 %v126
    %245 = vmatprep.subr.mxu0 %v131
    %246 = vmatpush1.msra.mxu0 %v130
    %247 = vmatprep.subr.mxu0 %v135
    %248 = vmatpush1.msra.mxu0 %v134
    %249 = vmatprep.subr.mxu0 %v139
    %250 = vmatpush1.msra.mxu0 %v138
    %251 = vmatprep.subr.mxu0 %v143
    %252 = vmatpush1.msra.mxu0 %v142
    %253 = vmatprep.subr.mxu0 0.0
    %254 = vmatpush1.msra.mxu0 0.0
    %255 = vmatprep.subr.mxu0 0.0
    %256 = vmatpush1.msra.mxu0 0.0
    %257 = vmatprep.subr.mxu0 0.0
    %258 = vmatpush1.msra.mxu0 0.0
    %259 = vmatprep.subr.mxu0 0.0
    %260 = vmatpush1.msra.mxu0 0.0
    %261 = vmatprep.subr.mxu0 0.0
    %262 = vmatpush1.msra.mxu0 0.0
    %263 = vmatprep.subr.mxu0 0.0
    %264 = vmatpush1.msra.mxu0 0.0
    %265 = vmatprep.subr.mxu0 0.0
    %266 = vmatpush1.msra.mxu0 0.0
    %267 = vmatprep.subr.mxu0 0.0
    %268 = vmatpush1.msra.mxu0 0.0
    %269 = vmatprep.subr.mxu0 0.0
    %270 = vmatpush1.msra.mxu0 0.0
    %271 = vmatprep.subr.mxu0 0.0
    %272 = vmatpush1.msra.mxu0 0.0
    %273 = vmatprep.subr.mxu0 0.0
    %274 = vmatpush1.msra.mxu0 0.0
    %275 = vmatprep.subr.mxu0 0.0
    %276 = vmatpush1.msra.mxu0 0.0
    %277 = vmatprep.subr.mxu0 0.0
    %278 = vmatpush1.msra.mxu0 0.0
    %279 = vmatprep.subr.mxu0 0.0
    %280 = vmatpush1.msra.mxu0 0.0
    %281 = vmatprep.subr.mxu0 0.0
    %282 = vmatpush1.msra.mxu0 0.0
    %283 = vmatprep.subr.mxu0 0.0
    %284 = vmatpush1.msra.mxu0 0.0
    %285 = vmatprep.mubr.f32.mxu0 0.0
    %286 = vmatmul.mubr.f32.gmra.mrb[0].mxu0 %v144
    %v287 = vpop.f32.mrb[0].mxu0
    %v288 = vadd.f32 0.0, %v287
    %v289 = vpop.f32.mrb[0].mxu0
    %v290 = vadd.f32 0.0, %v289
    %291 = vdwg.mxu0
    %v292 = vadd.f32 %v146, %v217
    %v293 = vadd.f32 %v147, %v219
    %v294 = vadd.f32 %v148, %v288
    %v295 = vadd.f32 %v149, %v290
    %v296 = vxor.u32 %v292, 2147483648
    %v297 = vmul.f32 %v296, 1.442695
    %v298 = vpow.pop %v297
    %v299 = vadd.f32 %v298, 1.0
    %v300 = vrcp.pop %v299
    %v301 = vmul.f32 1.0, %v300
    %v302 = vxor.u32 %v293, 2147483648
    %v303 = vmul.f32 %v302, 1.442695
    %v304 = vpow.pop %v303
    %v305 = vadd.f32 %v304, 1.0
    %v306 = vrcp.pop %v305
    %v307 = vmul.f32 1.0, %v306
    %v308 = vtanh.pop %v294
    %v309 = vxor.u32 %v295, 2147483648
    %v310 = vmul.f32 %v309, 1.442695
    %v311 = vpow.pop %v310
    %v312 = vadd.f32 %v311, 1.0
    %v313 = vrcp.pop %v312
    %v314 = vmul.f32 1.0, %v313
    %v315 = vmul.f32 %v307, %v145
    %v316 = vmul.f32 %v301, %v308
    %v317 = vadd.f32 %v315, %v316
    %v318 = vtanh.pop %v317
    %v319 = vmul.f32 %v314, %v318
    %s320 = scalar_lea.vmem [#allocation2], 32
    %v321 = vld [vmem:[%s320] sm:$0xff]
    %v322 = vld [vmem:[%s320 + $0x8] sm:$0xff]
    %v323 = vld [vmem:[%s320 + $0x10] sm:$0xff]
    %v324 = vld [vmem:[%s320 + $0x18] sm:$0xff]
    %325 = vmatprep.subr.mxu0 %v81
    %326 = vmatpush1.msra.mxu0 %v80
    %327 = vmatprep.subr.mxu0 %v85
    %328 = vmatpush1.msra.mxu0 %v84
    %329 = vmatprep.subr.mxu0 %v89
    %330 = vmatpush1.msra.mxu0 %v88
    %331 = vmatprep.subr.mxu0 %v93
    %332 = vmatpush1.msra.mxu0 %v92
    %333 = vmatprep.subr.mxu0 %v97
    %334 = vmatpush1.msra.mxu0 %v96
    %335 = vmatprep.subr.mxu0 %v101
    %336 = vmatpush1.msra.mxu0 %v100
    %337 = vmatprep.subr.mxu0 %v105
    %338 = vmatpush1.msra.mxu0 %v104
    %339 = vmatprep.subr.mxu0 %v109
    %340 = vmatpush1.msra.mxu0 %v108
    %341 = vmatprep.subr.mxu0 %v113
    %342 = vmatpush1.msra.mxu0 %v112
    %343 = vmatprep.subr.mxu0 %v117
    %344 = vmatpush1.msra.mxu0 %v116
    %345 = vmatprep.subr.mxu0 %v121
    %346 = vmatpush1.msra.mxu0 %v120
    %347 = vmatprep.subr.mxu0 %v125
    %348 = vmatpush1.msra.mxu0 %v124
    %349 = vmatprep.subr.mxu0 %v129
    %350 = vmatpush1.msra.mxu0 %v128
    %351 = vmatprep.subr.mxu0 %v133
    %352 = vmatpush1.msra.mxu0 %v132
    %353 = vmatprep.subr.mxu0 %v137
    %354 = vmatpush1.msra.mxu0 %v136
    %355 = vmatprep.subr.mxu0 %v141
    %356 = vmatpush1.msra.mxu0 %v140
    %357 = vmatprep.subr.mxu0 0.0
    %358 = vmatpush1.msra.mxu0 0.0
    %359 = vmatprep.subr.mxu0 0.0
    %360 = vmatpush1.msra.mxu0 0.0
    %361 = vmatprep.subr.mxu0 0.0
    %362 = vmatpush1.msra.mxu0 0.0
    %363 = vmatprep.subr.mxu0 0.0
    %364 = vmatpush1.msra.mxu0 0.0
    %365 = vmatprep.subr.mxu0 0.0
    %366 = vmatpush1.msra.mxu0 0.0
    %367 = vmatprep.subr.mxu0 0.0
    %368 = vmatpush1.msra.mxu0 0.0
    %369 = vmatprep.subr.mxu0 0.0
    %370 = vmatpush1.msra.mxu0 0.0
    %371 = vmatprep.subr.mxu0 0.0
    %372 = vmatpush1.msra.mxu0 0.0
    %373 = vmatprep.subr.mxu0 0.0
    %374 = vmatpush1.msra.mxu0 0.0
    %375 = vmatprep.subr.mxu0 0.0
    %376 = vmatpush1.msra.mxu0 0.0
    %377 = vmatprep.subr.mxu0 0.0
    %378 = vmatpush1.msra.mxu0 0.0
    %379 = vmatprep.subr.mxu0 0.0
    %380 = vmatpush1.msra.mxu0 0.0
    %381 = vmatprep.subr.mxu0 0.0
    %382 = vmatpush1.msra.mxu0 0.0
    %383 = vmatprep.subr.mxu0 0.0
    %384 = vmatpush1.msra.mxu0 0.0
    %385 = vmatprep.subr.mxu0 0.0
    %386 = vmatpush1.msra.mxu0 0.0
    %387 = vmatprep.subr.mxu0 0.0
    %388 = vmatpush1.msra.mxu0 0.0
    %389 = vmatprep.mubr.f32.mxu0 0.0
    %390 = vmatmul.mubr.f32.gmra.mrb[0].mxu0 %v319
    %v391 = vpop.f32.mrb[0].mxu0
    %v392 = vadd.f32 0.0, %v391
    %v393 = vpop.f32.mrb[0].mxu0
    %v394 = vadd.f32 0.0, %v393
    %395 = vdwg.mxu0
    %396 = vmatprep.subr.mxu0 %v83
    %397 = vmatpush1.msra.mxu0 %v82
    %398 = vmatprep.subr.mxu0 %v87
    %399 = vmatpush1.msra.mxu0 %v86
    %400 = vmatprep.subr.mxu0 %v91
    %401 = vmatpush1.msra.mxu0 %v90
    %402 = vmatprep.subr.mxu0 %v95
    %403 = vmatpush1.msra.mxu0 %v94
    %404 = vmatprep.subr.mxu0 %v99
    %405 = vmatpush1.msra.mxu0 %v98
    %406 = vmatprep.subr.mxu0 %v103
    %407 = vmatpush1.msra.mxu0 %v102
    %408 = vmatprep.subr.mxu0 %v107
    %409 = vmatpush1.msra.mxu0 %v106
    %410 = vmatprep.subr.mxu0 %v111
    %411 = vmatpush1.msra.mxu0 %v110
    %412 = vmatprep.subr.mxu0 %v115
    %413 = vmatpush1.msra.mxu0 %v114
    %414 = vmatprep.subr.mxu0 %v119
    %415 = vmatpush1.msra.mxu0 %v118
    %416 = vmatprep.subr.mxu0 %v123
    %417 = vmatpush1.msra.mxu0 %v122
    %418 = vmatprep.subr.mxu0 %v127
    %419 = vmatpush1.msra.mxu0 %v126
    %420 = vmatprep.subr.mxu0 %v131
    %421 = vmatpush1.msra.mxu0 %v130
    %422 = vmatprep.subr.mxu0 %v135
    %423 = vmatpush1.msra.mxu0 %v134
    %424 = vmatprep.subr.mxu0 %v139
    %425 = vmatpush1.msra.mxu0 %v138
    %426 = vmatprep.subr.mxu0 %v143
    %427 = vmatpush1.msra.mxu0 %v142
    %428 = vmatprep.subr.mxu0 0.0
    %429 = vmatpush1.msra.mxu0 0.0
    %430 = vmatprep.subr.mxu0 0.0
    %431 = vmatpush1.msra.mxu0 0.0
    %432 = vmatprep.subr.mxu0 0.0
    %433 = vmatpush1.msra.mxu0 0.0
    %434 = vmatprep.subr.mxu0 0.0
    %435 = vmatpush1.msra.mxu0 0.0
    %436 = vmatprep.subr.mxu0 0.0
    %437 = vmatpush1.msra.mxu0 0.0
    %438 = vmatprep.subr.mxu0 0.0
    %439 = vmatpush1.msra.mxu0 0.0
    %440 = vmatprep.subr.mxu0 0.0
    %441 = vmatpush1.msra.mxu0 0.0
    %442 = vmatprep.subr.mxu0 0.0
    %443 = vmatpush1.msra.mxu0 0.0
    %444 = vmatprep.subr.mxu0 0.0
    %445 = vmatpush1.msra.mxu0 0.0
    %446 = vmatprep.subr.mxu0 0.0
    %447 = vmatpush1.msra.mxu0 0.0
    %448 = vmatprep.subr.mxu0 0.0
    %449 = vmatpush1.msra.mxu0 0.0
    %450 = vmatprep.subr.mxu0 0.0
    %451 = vmatpush1.msra.mxu0 0.0
    %452 = vmatprep.subr.mxu0 0.0
    %453 = vmatpush1.msra.mxu0 0.0
    %454 = vmatprep.subr.mxu0 0.0
    %455 = vmatpush1.msra.mxu0 0.0
    %456 = vmatprep.subr.mxu0 0.0
    %457 = vmatpush1.msra.mxu0 0.0
    %458 = vmatprep.subr.mxu0 0.0
    %459 = vmatpush1.msra.mxu0 0.0
    %460 = vmatprep.mubr.f32.mxu0 0.0
    %461 = vmatmul.mubr.f32.gmra.mrb[0].mxu0 %v319
    %v462 = vpop.f32.mrb[0].mxu0
    %v463 = vadd.f32 0.0, %v462
    %v464 = vpop.f32.mrb[0].mxu0
    %v465 = vadd.f32 0.0, %v464
    %466 = vdwg.mxu0
    %v467 = vadd.f32 %v321, %v392
    %v468 = vadd.f32 %v322, %v394
    %v469 = vadd.f32 %v323, %v463
    %v470 = vadd.f32 %v324, %v465
    %v471 = vxor.u32 %v467, 2147483648
    %v472 = vmul.f32 %v471, 1.442695
    %v473 = vpow.pop %v472
    %v474 = vadd.f32 %v473, 1.0
    %v475 = vrcp.pop %v474
    %v476 = vmul.f32 1.0, %v475
    %v477 = vxor.u32 %v468, 2147483648
    %v478 = vmul.f32 %v477, 1.442695
    %v479 = vpow.pop %v478
    %v480 = vadd.f32 %v479, 1.0
    %v481 = vrcp.pop %v480
    %v482 = vmul.f32 1.0, %v481
    %v483 = vtanh.pop %v469
    %v484 = vxor.u32 %v470, 2147483648
    %v485 = vmul.f32 %v484, 1.442695
    %v486 = vpow.pop %v485
    %v487 = vadd.f32 %v486, 1.0
    %v488 = vrcp.pop %v487
    %v489 = vmul.f32 1.0, %v488
    %v490 = vmul.f32 %v482, %v317
    %v491 = vmul.f32 %v476, %v483
    %v492 = vadd.f32 %v490, %v491
    %v493 = vtanh.pop %v492
    %v494 = vmul.f32 %v489, %v493
    %s495 = scalar_lea.vmem [#allocation2], 64
    %v496 = vld [vmem:[%s495] sm:$0xff]
    %v497 = vld [vmem:[%s495 + $0x8] sm:$0xff]
    %v498 = vld [vmem:[%s495 + $0x10] sm:$0xff]
    %v499 = vld [vmem:[%s495 + $0x18] sm:$0xff]
    %500 = vmatprep.subr.mxu0 %v81
    %501 = vmatpush1.msra.mxu0 %v80
    %502 = vmatprep.subr.mxu0 %v85
    %503 = vmatpush1.msra.mxu0 %v84
    %504 = vmatprep.subr.mxu0 %v89
    %505 = vmatpush1.msra.mxu0 %v88
    %506 = vmatprep.subr.mxu0 %v93
    %507 = vmatpush1.msra.mxu0 %v92
    %508 = vmatprep.subr.mxu0 %v97
    %509 = vmatpush1.msra.mxu0 %v96
    %510 = vmatprep.subr.mxu0 %v101
    %511 = vmatpush1.msra.mxu0 %v100
    %512 = vmatprep.subr.mxu0 %v105
    %513 = vmatpush1.msra.mxu0 %v104
    %514 = vmatprep.subr.mxu0 %v109
    %515 = vmatpush1.msra.mxu0 %v108
    %516 = vmatprep.subr.mxu0 %v113
    %517 = vmatpush1.msra.mxu0 %v112
    %518 = vmatprep.subr.mxu0 %v117
    %519 = vmatpush1.msra.mxu0 %v116
    %520 = vmatprep.subr.mxu0 %v121
    %521 = vmatpush1.msra.mxu0 %v120
    %522 = vmatprep.subr.mxu0 %v125
    %523 = vmatpush1.msra.mxu0 %v124
    %524 = vmatprep.subr.mxu0 %v129
    %525 = vmatpush1.msra.mxu0 %v128
    %526 = vmatprep.subr.mxu0 %v133
    %527 = vmatpush1.msra.mxu0 %v132
    %528 = vmatprep.subr.mxu0 %v137
    %529 = vmatpush1.msra.mxu0 %v136
    %530 = vmatprep.subr.mxu0 %v141
    %531 = vmatpush1.msra.mxu0 %v140
    %532 = vmatprep.subr.mxu0 0.0
    %533 = vmatpush1.msra.mxu0 0.0
    %534 = vmatprep.subr.mxu0 0.0
    %535 = vmatpush1.msra.mxu0 0.0
    %536 = vmatprep.subr.mxu0 0.0
    %537 = vmatpush1.msra.mxu0 0.0
    %538 = vmatprep.subr.mxu0 0.0
    %539 = vmatpush1.msra.mxu0 0.0
    %540 = vmatprep.subr.mxu0 0.0
    %541 = vmatpush1.msra.mxu0 0.0
    %542 = vmatprep.subr.mxu0 0.0
    %543 = vmatpush1.msra.mxu0 0.0
    %544 = vmatprep.subr.mxu0 0.0
    %545 = vmatpush1.msra.mxu0 0.0
    %546 = vmatprep.subr.mxu0 0.0
    %547 = vmatpush1.msra.mxu0 0.0
    %548 = vmatprep.subr.mxu0 0.0
    %549 = vmatpush1.msra.mxu0 0.0
    %550 = vmatprep.subr.mxu0 0.0
    %551 = vmatpush1.msra.mxu0 0.0
    %552 = vmatprep.subr.mxu0 0.0
    %553 = vmatpush1.msra.mxu0 0.0
    %554 = vmatprep.subr.mxu0 0.0
    %555 = vmatpush1.msra.mxu0 0.0
    %556 = vmatprep.subr.mxu0 0.0
    %557 = vmatpush1.msra.mxu0 0.0
    %558 = vmatprep.subr.mxu0 0.0
    %559 = vmatpush1.msra.mxu0 0.0
    %560 = vmatprep.subr.mxu0 0.0
    %561 = vmatpush1.msra.mxu0 0.0
    %562 = vmatprep.subr.mxu0 0.0
    %563 = vmatpush1.msra.mxu0 0.0
    %564 = vmatprep.mubr.f32.mxu0 0.0
    %565 = vmatmul.mubr.f32.gmra.mrb[0].mxu0 %v494
    %v566 = vpop.f32.mrb[0].mxu0
    %v567 = vadd.f32 0.0, %v566
    %v568 = vpop.f32.mrb[0].mxu0
    %v569 = vadd.f32 0.0, %v568
    %570 = vdwg.mxu0
    %571 = vmatprep.subr.mxu0 %v83
    %572 = vmatpush1.msra.mxu0 %v82
    %573 = vmatprep.subr.mxu0 %v87
    %574 = vmatpush1.msra.mxu0 %v86
    %575 = vmatprep.subr.mxu0 %v91
    %576 = vmatpush1.msra.mxu0 %v90
    %577 = vmatprep.subr.mxu0 %v95
    %578 = vmatpush1.msra.mxu0 %v94
    %579 = vmatprep.subr.mxu0 %v99
    %580 = vmatpush1.msra.mxu0 %v98
    %581 = vmatprep.subr.mxu0 %v103
    %582 = vmatpush1.msra.mxu0 %v102
    %583 = vmatprep.subr.mxu0 %v107
    %584 = vmatpush1.msra.mxu0 %v106
    %585 = vmatprep.subr.mxu0 %v111
    %586 = vmatpush1.msra.mxu0 %v110
    %587 = vmatprep.subr.mxu0 %v115
    %588 = vmatpush1.msra.mxu0 %v114
    %589 = vmatprep.subr.mxu0 %v119
    %590 = vmatpush1.msra.mxu0 %v118
    %591 = vmatprep.subr.mxu0 %v123
    %592 = vmatpush1.msra.mxu0 %v122
    %593 = vmatprep.subr.mxu0 %v127
    %594 = vmatpush1.msra.mxu0 %v126
    %595 = vmatprep.subr.mxu0 %v131
    %596 = vmatpush1.msra.mxu0 %v130
    %597 = vmatprep.subr.mxu0 %v135
    %598 = vmatpush1.msra.mxu0 %v134
    %599 = vmatprep.subr.mxu0 %v139
    %600 = vmatpush1.msra.mxu0 %v138
    %601 = vmatprep.subr.mxu0 %v143
    %602 = vmatpush1.msra.mxu0 %v142
    %603 = vmatprep.subr.mxu0 0.0
    %604 = vmatpush1.msra.mxu0 0.0
    %605 = vmatprep.subr.mxu0 0.0
    %606 = vmatpush1.msra.mxu0 0.0
    %607 = vmatprep.subr.mxu0 0.0
    %608 = vmatpush1.msra.mxu0 0.0
    %609 = vmatprep.subr.mxu0 0.0
    %610 = vmatpush1.msra.mxu0 0.0
    %611 = vmatprep.subr.mxu0 0.0
    %612 = vmatpush1.msra.mxu0 0.0
    %613 = vmatprep.subr.mxu0 0.0
    %614 = vmatpush1.msra.mxu0 0.0
    %615 = vmatprep.subr.mxu0 0.0
    %616 = vmatpush1.msra.mxu0 0.0
    %617 = vmatprep.subr.mxu0 0.0
    %618 = vmatpush1.msra.mxu0 0.0
    %619 = vmatprep.subr.mxu0 0.0
    %620 = vmatpush1.msra.mxu0 0.0
    %621 = vmatprep.subr.mxu0 0.0
    %622 = vmatpush1.msra.mxu0 0.0
    %623 = vmatprep.subr.mxu0 0.0
    %624 = vmatpush1.msra.mxu0 0.0
    %625 = vmatprep.subr.mxu0 0.0
    %626 = vmatpush1.msra.mxu0 0.0
    %627 = vmatprep.subr.mxu0 0.0
    %628 = vmatpush1.msra.mxu0 0.0
    %629 = vmatprep.subr.mxu0 0.0
    %630 = vmatpush1.msra.mxu0 0.0
    %631 = vmatprep.subr.mxu0 0.0
    %632 = vmatpush1.msra.mxu0 0.0
    %633 = vmatprep.subr.mxu0 0.0
    %634 = vmatpush1.msra.mxu0 0.0
    %635 = vmatprep.mubr.f32.mxu0 0.0
    %636 = vmatmul.mubr.f32.gmra.mrb[0].mxu0 %v494
    %v637 = vpop.f32.mrb[0].mxu0
    %v638 = vadd.f32 0.0, %v637
    %v639 = vpop.f32.mrb[0].mxu0
    %v640 = vadd.f32 0.0, %v639
    %641 = vdwg.mxu0
    %v642 = vadd.f32 %v496, %v567
    %v643 = vadd.f32 %v497, %v569
    %v644 = vadd.f32 %v498, %v638
    %v645 = vadd.f32 %v499, %v640
    %v646 = vxor.u32 %v642, 2147483648
    %v647 = vmul.f32 %v646, 1.442695
    %v648 = vpow.pop %v647
    %v649 = vadd.f32 %v648, 1.0
    %v650 = vrcp.pop %v649
    %v651 = vmul.f32 1.0, %v650
    %v652 = vxor.u32 %v643, 2147483648
    %v653 = vmul.f32 %v652, 1.442695
    %v654 = vpow.pop %v653
    %v655 = vadd.f32 %v654, 1.0
    %v656 = vrcp.pop %v655
    %v657 = vmul.f32 1.0, %v656
    %v658 = vtanh.pop %v644
    %v659 = vxor.u32 %v645, 2147483648
    %v660 = vmul.f32 %v659, 1.442695
    %v661 = vpow.pop %v660
    %v662 = vadd.f32 %v661, 1.0
    %v663 = vrcp.pop %v662
    %v664 = vmul.f32 1.0, %v663
    %v665 = vmul.f32 %v657, %v492
    %v666 = vmul.f32 %v651, %v658
    %v667 = vadd.f32 %v665, %v666
    %v668 = vtanh.pop %v667
    %v669 = vmul.f32 %v664, %v668
    %s670 = scalar_lea.vmem [#allocation2], 96
    %v671 = vld [vmem:[%s670] sm:$0xff]
    %v672 = vld [vmem:[%s670 + $0x8] sm:$0xff]
    %v673 = vld [vmem:[%s670 + $0x10] sm:$0xff]
    %v674 = vld [vmem:[%s670 + $0x18] sm:$0xff]
    %675 = vmatprep.subr.mxu0 %v81
    %676 = vmatpush1.msra.mxu0 %v80
    %677 = vmatprep.subr.mxu0 %v85
    %678 = vmatpush1.msra.mxu0 %v84
    %679 = vmatprep.subr.mxu0 %v89
    %680 = vmatpush1.msra.mxu0 %v88
    %681 = vmatprep.subr.mxu0 %v93
    %682 = vmatpush1.msra.mxu0 %v92
    %683 = vmatprep.subr.mxu0 %v97
    %684 = vmatpush1.msra.mxu0 %v96
    %685 = vmatprep.subr.mxu0 %v101
    %686 = vmatpush1.msra.mxu0 %v100
    %687 = vmatprep.subr.mxu0 %v105
    %688 = vmatpush1.msra.mxu0 %v104
    %689 = vmatprep.subr.mxu0 %v109
    %690 = vmatpush1.msra.mxu0 %v108
    %691 = vmatprep.subr.mxu0 %v113
    %692 = vmatpush1.msra.mxu0 %v112
    %693 = vmatprep.subr.mxu0 %v117
    %694 = vmatpush1.msra.mxu0 %v116
    %695 = vmatprep.subr.mxu0 %v121
    %696 = vmatpush1.msra.mxu0 %v120
    %697 = vmatprep.subr.mxu0 %v125
    %698 = vmatpush1.msra.mxu0 %v124
    %699 = vmatprep.subr.mxu0 %v129
    %700 = vmatpush1.msra.mxu0 %v128
    %701 = vmatprep.subr.mxu0 %v133
    %702 = vmatpush1.msra.mxu0 %v132
    %703 = vmatprep.subr.mxu0 %v137
    %704 = vmatpush1.msra.mxu0 %v136
    %705 = vmatprep.subr.mxu0 %v141
    %706 = vmatpush1.msra.mxu0 %v140
    %707 = vmatprep.subr.mxu0 0.0
    %708 = vmatpush1.msra.mxu0 0.0
    %709 = vmatprep.subr.mxu0 0.0
    %710 = vmatpush1.msra.mxu0 0.0
    %711 = vmatprep.subr.mxu0 0.0
    %712 = vmatpush1.msra.mxu0 0.0
    %713 = vmatprep.subr.mxu0 0.0
    %714 = vmatpush1.msra.mxu0 0.0
    %715 = vmatprep.subr.mxu0 0.0
    %716 = vmatpush1.msra.mxu0 0.0
    %717 = vmatprep.subr.mxu0 0.0
    %718 = vmatpush1.msra.mxu0 0.0
    %719 = vmatprep.subr.mxu0 0.0
    %720 = vmatpush1.msra.mxu0 0.0
    %721 = vmatprep.subr.mxu0 0.0
    %722 = vmatpush1.msra.mxu0 0.0
    %723 = vmatprep.subr.mxu0 0.0
    %724 = vmatpush1.msra.mxu0 0.0
    %725 = vmatprep.subr.mxu0 0.0
    %726 = vmatpush1.msra.mxu0 0.0
    %727 = vmatprep.subr.mxu0 0.0
    %728 = vmatpush1.msra.mxu0 0.0
    %729 = vmatprep.subr.mxu0 0.0
    %730 = vmatpush1.msra.mxu0 0.0
    %731 = vmatprep.subr.mxu0 0.0
    %732 = vmatpush1.msra.mxu0 0.0
    %733 = vmatprep.subr.mxu0 0.0
    %734 = vmatpush1.msra.mxu0 0.0
    %735 = vmatprep.subr.mxu0 0.0
    %736 = vmatpush1.msra.mxu0 0.0
    %737 = vmatprep.subr.mxu0 0.0
    %738 = vmatpush1.msra.mxu0 0.0
    %739 = vmatprep.mubr.f32.mxu0 0.0
    %740 = vmatmul.mubr.f32.gmra.mrb[0].mxu0 %v669
    %v741 = vpop.f32.mrb[0].mxu0
    %v742 = vadd.f32 0.0, %v741
    %v743 = vpop.f32.mrb[0].mxu0
    %v744 = vadd.f32 0.0, %v743
    %745 = vdwg.mxu0
    %746 = vmatprep.subr.mxu0 %v83
    %747 = vmatpush1.msra.mxu0 %v82
    %748 = vmatprep.subr.mxu0 %v87
    %749 = vmatpush1.msra.mxu0 %v86
    %750 = vmatprep.subr.mxu0 %v91
    %751 = vmatpush1.msra.mxu0 %v90
    %752 = vmatprep.subr.mxu0 %v95
    %753 = vmatpush1.msra.mxu0 %v94
    %754 = vmatprep.subr.mxu0 %v99
    %755 = vmatpush1.msra.mxu0 %v98
    %756 = vmatprep.subr.mxu0 %v103
    %757 = vmatpush1.msra.mxu0 %v102
    %758 = vmatprep.subr.mxu0 %v107
    %759 = vmatpush1.msra.mxu0 %v106
    %760 = vmatprep.subr.mxu0 %v111
    %761 = vmatpush1.msra.mxu0 %v110
    %762 = vmatprep.subr.mxu0 %v115
    %763 = vmatpush1.msra.mxu0 %v114
    %764 = vmatprep.subr.mxu0 %v119
    %765 = vmatpush1.msra.mxu0 %v118
    %766 = vmatprep.subr.mxu0 %v123
    %767 = vmatpush1.msra.mxu0 %v122
    %768 = vmatprep.subr.mxu0 %v127
    %769 = vmatpush1.msra.mxu0 %v126
    %770 = vmatprep.subr.mxu0 %v131
    %771 = vmatpush1.msra.mxu0 %v130
    %772 = vmatprep.subr.mxu0 %v135
    %773 = vmatpush1.msra.mxu0 %v134
    %774 = vmatprep.subr.mxu0 %v139
    %775 = vmatpush1.msra.mxu0 %v138
    %776 = vmatprep.subr.mxu0 %v143
    %777 = vmatpush1.msra.mxu0 %v142
    %778 = vmatprep.subr.mxu0 0.0
    %779 = vmatpush1.msra.mxu0 0.0
    %780 = vmatprep.subr.mxu0 0.0
    %781 = vmatpush1.msra.mxu0 0.0
    %782 = vmatprep.subr.mxu0 0.0
    %783 = vmatpush1.msra.mxu0 0.0
    %784 = vmatprep.subr.mxu0 0.0
    %785 = vmatpush1.msra.mxu0 0.0
    %786 = vmatprep.subr.mxu0 0.0
    %787 = vmatpush1.msra.mxu0 0.0
    %788 = vmatprep.subr.mxu0 0.0
    %789 = vmatpush1.msra.mxu0 0.0
    %790 = vmatprep.subr.mxu0 0.0
    %791 = vmatpush1.msra.mxu0 0.0
    %792 = vmatprep.subr.mxu0 0.0
    %793 = vmatpush1.msra.mxu0 0.0
    %794 = vmatprep.subr.mxu0 0.0
    %795 = vmatpush1.msra.mxu0 0.0
    %796 = vmatprep.subr.mxu0 0.0
    %797 = vmatpush1.msra.mxu0 0.0
    %798 = vmatprep.subr.mxu0 0.0
    %799 = vmatpush1.msra.mxu0 0.0
    %800 = vmatprep.subr.mxu0 0.0
    %801 = vmatpush1.msra.mxu0 0.0
    %802 = vmatprep.subr.mxu0 0.0
    %803 = vmatpush1.msra.mxu0 0.0
    %804 = vmatprep.subr.mxu0 0.0
    %805 = vmatpush1.msra.mxu0 0.0
    %806 = vmatprep.subr.mxu0 0.0
    %807 = vmatpush1.msra.mxu0 0.0
    %808 = vmatprep.subr.mxu0 0.0
    %809 = vmatpush1.msra.mxu0 0.0
    %810 = vmatprep.mubr.f32.mxu0 0.0
    %811 = vmatmul.mubr.f32.gmra.mrb[0].mxu0 %v669
    %v812 = vpop.f32.mrb[0].mxu0
    %v813 = vadd.f32 0.0, %v812
    %v814 = vpop.f32.mrb[0].mxu0
    %v815 = vadd.f32 0.0, %v814
    %816 = vdwg.mxu0
    %v817 = vadd.f32 %v671, %v742
    %v818 = vadd.f32 %v672, %v744
    %v819 = vadd.f32 %v673, %v813
    %v820 = vadd.f32 %v674, %v815
    %v821 = vxor.u32 %v817, 2147483648
    %v822 = vmul.f32 %v821, 1.442695
    %v823 = vpow.pop %v822
    %v824 = vadd.f32 %v823, 1.0
    %v825 = vrcp.pop %v824
    %v826 = vmul.f32 1.0, %v825
    %v827 = vxor.u32 %v818, 2147483648
    %v828 = vmul.f32 %v827, 1.442695
    %v829 = vpow.pop %v828
    %v830 = vadd.f32 %v829, 1.0
    %v831 = vrcp.pop %v830
    %v832 = vmul.f32 1.0, %v831
    %v833 = vtanh.pop %v819
    %v834 = vxor.u32 %v820, 2147483648
    %v835 = vmul.f32 %v834, 1.442695
    %v836 = vpow.pop %v835
    %v837 = vadd.f32 %v836, 1.0
    %v838 = vrcp.pop %v837
    %v839 = vmul.f32 1.0, %v838
    %v840 = vmul.f32 %v832, %v667
    %v841 = vmul.f32 %v826, %v833
    %v842 = vadd.f32 %v840, %v841
    %v843 = vtanh.pop %v842
    %v844 = vmul.f32 %v839, %v843
    %s845 = scalar_lea.vmem [#allocation2], 128
    %v846 = vld [vmem:[%s845] sm:$0xff]
    %v847 = vld [vmem:[%s845 + $0x8] sm:$0xff]
    %v848 = vld [vmem:[%s845 + $0x10] sm:$0xff]
    %v849 = vld [vmem:[%s845 + $0x18] sm:$0xff]
    %850 = vmatprep.subr.mxu0 %v81
    %851 = vmatpush1.msra.mxu0 %v80
    %852 = vmatprep.subr.mxu0 %v85
    %853 = vmatpush1.msra.mxu0 %v84
    %854 = vmatprep.subr.mxu0 %v89
    %855 = vmatpush1.msra.mxu0 %v88
    %856 = vmatprep.subr.mxu0 %v93
    %857 = vmatpush1.msra.mxu0 %v92
    %858 = vmatprep.subr.mxu0 %v97
    %859 = vmatpush1.msra.mxu0 %v96
    %860 = vmatprep.subr.mxu0 %v101
    %861 = vmatpush1.msra.mxu0 %v100
    %862 = vmatprep.subr.mxu0 %v105
    %863 = vmatpush1.msra.mxu0 %v104
    %864 = vmatprep.subr.mxu0 %v109
    %865 = vmatpush1.msra.mxu0 %v108
    %866 = vmatprep.subr.mxu0 %v113
    %867 = vmatpush1.msra.mxu0 %v112
    %868 = vmatprep.subr.mxu0 %v117
    %869 = vmatpush1.msra.mxu0 %v116
    %870 = vmatprep.subr.mxu0 %v121
    %871 = vmatpush1.msra.mxu0 %v120
    %872 = vmatprep.subr.mxu0 %v125
    %873 = vmatpush1.msra.mxu0 %v124
    %874 = vmatprep.subr.mxu0 %v129
    %875 = vmatpush1.msra.mxu0 %v128
    %876 = vmatprep.subr.mxu0 %v133
    %877 = vmatpush1.msra.mxu0 %v132
    %878 = vmatprep.subr.mxu0 %v137
    %879 = vmatpush1.msra.mxu0 %v136
    %880 = vmatprep.subr.mxu0 %v141
    %881 = vmatpush1.msra.mxu0 %v140
    %882 = vmatprep.subr.mxu0 0.0
    %883 = vmatpush1.msra.mxu0 0.0
    %884 = vmatprep.subr.mxu0 0.0
    %885 = vmatpush1.msra.mxu0 0.0
    %886 = vmatprep.subr.mxu0 0.0
    %887 = vmatpush1.msra.mxu0 0.0
    %888 = vmatprep.subr.mxu0 0.0
    %889 = vmatpush1.msra.mxu0 0.0
    %890 = vmatprep.subr.mxu0 0.0
    %891 = vmatpush1.msra.mxu0 0.0
    %892 = vmatprep.subr.mxu0 0.0
    %893 = vmatpush1.msra.mxu0 0.0
    %894 = vmatprep.subr.mxu0 0.0
    %895 = vmatpush1.msra.mxu0 0.0
    %896 = vmatprep.subr.mxu0 0.0
    %897 = vmatpush1.msra.mxu0 0.0
    %898 = vmatprep.subr.mxu0 0.0
    %899 = vmatpush1.msra.mxu0 0.0
    %900 = vmatprep.subr.mxu0 0.0
    %901 = vmatpush1.msra.mxu0 0.0
    %902 = vmatprep.subr.mxu0 0.0
    %903 = vmatpush1.msra.mxu0 0.0
    %904 = vmatprep.subr.mxu0 0.0
    %905 = vmatpush1.msra.mxu0 0.0
    %906 = vmatprep.subr.mxu0 0.0
    %907 = vmatpush1.msra.mxu0 0.0
    %908 = vmatprep.subr.mxu0 0.0
    %909 = vmatpush1.msra.mxu0 0.0
    %910 = vmatprep.subr.mxu0 0.0
    %911 = vmatpush1.msra.mxu0 0.0
    %912 = vmatprep.subr.mxu0 0.0
    %913 = vmatpush1.msra.mxu0 0.0
    %914 = vmatprep.mubr.f32.mxu0 0.0
    %915 = vmatmul.mubr.f32.gmra.mrb[0].mxu0 %v844
    %v916 = vpop.f32.mrb[0].mxu0
    %v917 = vadd.f32 0.0, %v916
    %v918 = vpop.f32.mrb[0].mxu0
    %v919 = vadd.f32 0.0, %v918
    %920 = vdwg.mxu0
    %921 = vmatprep.subr.mxu0 %v83
    %922 = vmatpush1.msra.mxu0 %v82
    %923 = vmatprep.subr.mxu0 %v87
    %924 = vmatpush1.msra.mxu0 %v86
    %925 = vmatprep.subr.mxu0 %v91
    %926 = vmatpush1.msra.mxu0 %v90
    %927 = vmatprep.subr.mxu0 %v95
    %928 = vmatpush1.msra.mxu0 %v94
    %929 = vmatprep.subr.mxu0 %v99
    %930 = vmatpush1.msra.mxu0 %v98
    %931 = vmatprep.subr.mxu0 %v103
    %932 = vmatpush1.msra.mxu0 %v102
    %933 = vmatprep.subr.mxu0 %v107
    %934 = vmatpush1.msra.mxu0 %v106
    %935 = vmatprep.subr.mxu0 %v111
    %936 = vmatpush1.msra.mxu0 %v110
    %937 = vmatprep.subr.mxu0 %v115
    %938 = vmatpush1.msra.mxu0 %v114
    %939 = vmatprep.subr.mxu0 %v119
    %940 = vmatpush1.msra.mxu0 %v118
    %941 = vmatprep.subr.mxu0 %v123
    %942 = vmatpush1.msra.mxu0 %v122
    %943 = vmatprep.subr.mxu0 %v127
    %944 = vmatpush1.msra.mxu0 %v126
    %945 = vmatprep.subr.mxu0 %v131
    %946 = vmatpush1.msra.mxu0 %v130
    %947 = vmatprep.subr.mxu0 %v135
    %948 = vmatpush1.msra.mxu0 %v134
    %949 = vmatprep.subr.mxu0 %v139
    %950 = vmatpush1.msra.mxu0 %v138
    %951 = vmatprep.subr.mxu0 %v143
    %952 = vmatpush1.msra.mxu0 %v142
    %953 = vmatprep.subr.mxu0 0.0
    %954 = vmatpush1.msra.mxu0 0.0
    %955 = vmatprep.subr.mxu0 0.0
    %956 = vmatpush1.msra.mxu0 0.0
    %957 = vmatprep.subr.mxu0 0.0
    %958 = vmatpush1.msra.mxu0 0.0
    %959 = vmatprep.subr.mxu0 0.0
    %960 = vmatpush1.msra.mxu0 0.0
    %961 = vmatprep.subr.mxu0 0.0
    %962 = vmatpush1.msra.mxu0 0.0
    %963 = vmatprep.subr.mxu0 0.0
    %964 = vmatpush1.msra.mxu0 0.0
    %965 = vmatprep.subr.mxu0 0.0
    %966 = vmatpush1.msra.mxu0 0.0
    %967 = vmatprep.subr.mxu0 0.0
    %968 = vmatpush1.msra.mxu0 0.0
    %969 = vmatprep.subr.mxu0 0.0
    %970 = vmatpush1.msra.mxu0 0.0
    %971 = vmatprep.subr.mxu0 0.0
    %972 = vmatpush1.msra.mxu0 0.0
    %973 = vmatprep.subr.mxu0 0.0
    %974 = vmatpush1.msra.mxu0 0.0
    %975 = vmatprep.subr.mxu0 0.0
    %976 = vmatpush1.msra.mxu0 0.0
    %977 = vmatprep.subr.mxu0 0.0
    %978 = vmatpush1.msra.mxu0 0.0
    %979 = vmatprep.subr.mxu0 0.0
    %980 = vmatpush1.msra.mxu0 0.0
    %981 = vmatprep.subr.mxu0 0.0
    %982 = vmatpush1.msra.mxu0 0.0
    %983 = vmatprep.subr.mxu0 0.0
    %984 = vmatpush1.msra.mxu0 0.0
    %985 = vmatprep.mubr.f32.mxu0 0.0
    %986 = vmatmul.mubr.f32.gmra.mrb[0].mxu0 %v844
    %v987 = vpop.f32.mrb[0].mxu0
    %v988 = vadd.f32 0.0, %v987
    %v989 = vpop.f32.mrb[0].mxu0
    %v990 = vadd.f32 0.0, %v989
    %991 = vdwg.mxu0
    %v992 = vadd.f32 %v846, %v917
    %v993 = vadd.f32 %v847, %v919
    %v994 = vadd.f32 %v848, %v988
    %v995 = vadd.f32 %v849, %v990
    %v996 = vxor.u32 %v992, 2147483648
    %v997 = vmul.f32 %v996, 1.442695
    %v998 = vpow.pop %v997
    %v999 = vadd.f32 %v998, 1.0
    %v1000 = vrcp.pop %v999
    %v1001 = vmul.f32 1.0, %v1000
    %v1002 = vxor.u32 %v993, 2147483648
    %v1003 = vmul.f32 %v1002, 1.442695
    %v1004 = vpow.pop %v1003
    %v1005 = vadd.f32 %v1004, 1.0
    %v1006 = vrcp.pop %v1005
    %v1007 = vmul.f32 1.0, %v1006
    %v1008 = vtanh.pop %v994
    %v1009 = vxor.u32 %v995, 2147483648
    %v1010 = vmul.f32 %v1009, 1.442695
    %v1011 = vpow.pop %v1010
    %v1012 = vadd.f32 %v1011, 1.0
    %v1013 = vrcp.pop %v1012
    %v1014 = vmul.f32 1.0, %v1013
    %v1015 = vmul.f32 %v1007, %v842
    %v1016 = vmul.f32 %v1001, %v1008
    %v1017 = vadd.f32 %v1015, %v1016
    %v1018 = vtanh.pop %v1017
    %v1019 = vmul.f32 %v1014, %v1018
    %s1020 = scalar_lea.vmem [#allocation2], 160
    %v1021 = vld [vmem:[%s1020] sm:$0xff]
    %v1022 = vld [vmem:[%s1020 + $0x8] sm:$0xff]
    %v1023 = vld [vmem:[%s1020 + $0x10] sm:$0xff]
    %v1024 = vld [vmem:[%s1020 + $0x18] sm:$0xff]
    %1025 = vmatprep.subr.mxu0 %v81
    %1026 = vmatpush1.msra.mxu0 %v80
    %1027 = vmatprep.subr.mxu0 %v85
    %1028 = vmatpush1.msra.mxu0 %v84
    %1029 = vmatprep.subr.mxu0 %v89
    %1030 = vmatpush1.msra.mxu0 %v88
    %1031 = vmatprep.subr.mxu0 %v93
    %1032 = vmatpush1.msra.mxu0 %v92
    %1033 = vmatprep.subr.mxu0 %v97
    %1034 = vmatpush1.msra.mxu0 %v96
    %1035 = vmatprep.subr.mxu0 %v101
    %1036 = vmatpush1.msra.mxu0 %v100
    %1037 = vmatprep.subr.mxu0 %v105
    %1038 = vmatpush1.msra.mxu0 %v104
    %1039 = vmatprep.subr.mxu0 %v109
    %1040 = vmatpush1.msra.mxu0 %v108
    %1041 = vmatprep.subr.mxu0 %v113
    %1042 = vmatpush1.msra.mxu0 %v112
    %1043 = vmatprep.subr.mxu0 %v117
    %1044 = vmatpush1.msra.mxu0 %v116
    %1045 = vmatprep.subr.mxu0 %v121
    %1046 = vmatpush1.msra.mxu0 %v120
    %1047 = vmatprep.subr.mxu0 %v125
    %1048 = vmatpush1.msra.mxu0 %v124
    %1049 = vmatprep.subr.mxu0 %v129
    %1050 = vmatpush1.msra.mxu0 %v128
    %1051 = vmatprep.subr.mxu0 %v133
    %1052 = vmatpush1.msra.mxu0 %v132
    %1053 = vmatprep.subr.mxu0 %v137
    %1054 = vmatpush1.msra.mxu0 %v136
    %1055 = vmatprep.subr.mxu0 %v141
    %1056 = vmatpush1.msra.mxu0 %v140
    %1057 = vmatprep.subr.mxu0 0.0
    %1058 = vmatpush1.msra.mxu0 0.0
    %1059 = vmatprep.subr.mxu0 0.0
    %1060 = vmatpush1.msra.mxu0 0.0
    %1061 = vmatprep.subr.mxu0 0.0
    %1062 = vmatpush1.msra.mxu0 0.0
    %1063 = vmatprep.subr.mxu0 0.0
    %1064 = vmatpush1.msra.mxu0 0.0
    %1065 = vmatprep.subr.mxu0 0.0
    %1066 = vmatpush1.msra.mxu0 0.0
    %1067 = vmatprep.subr.mxu0 0.0
    %1068 = vmatpush1.msra.mxu0 0.0
    %1069 = vmatprep.subr.mxu0 0.0
    %1070 = vmatpush1.msra.mxu0 0.0
    %1071 = vmatprep.subr.mxu0 0.0
    %1072 = vmatpush1.msra.mxu0 0.0
    %1073 = vmatprep.subr.mxu0 0.0
    %1074 = vmatpush1.msra.mxu0 0.0
    %1075 = vmatprep.subr.mxu0 0.0
    %1076 = vmatpush1.msra.mxu0 0.0
    %1077 = vmatprep.subr.mxu0 0.0
    %1078 = vmatpush1.msra.mxu0 0.0
    %1079 = vmatprep.subr.mxu0 0.0
    %1080 = vmatpush1.msra.mxu0 0.0
    %1081 = vmatprep.subr.mxu0 0.0
    %1082 = vmatpush1.msra.mxu0 0.0
    %1083 = vmatprep.subr.mxu0 0.0
    %1084 = vmatpush1.msra.mxu0 0.0
    %1085 = vmatprep.subr.mxu0 0.0
    %1086 = vmatpush1.msra.mxu0 0.0
    %1087 = vmatprep.subr.mxu0 0.0
    %1088 = vmatpush1.msra.mxu0 0.0
    %1089 = vmatprep.mubr.f32.mxu0 0.0
    %1090 = vmatmul.mubr.f32.gmra.mrb[0].mxu0 %v1019
    %v1091 = vpop.f32.mrb[0].mxu0
    %v1092 = vadd.f32 0.0, %v1091
    %v1093 = vpop.f32.mrb[0].mxu0
    %v1094 = vadd.f32 0.0, %v1093
    %1095 = vdwg.mxu0
    %1096 = vmatprep.subr.mxu0 %v83
    %1097 = vmatpush1.msra.mxu0 %v82
    %1098 = vmatprep.subr.mxu0 %v87
    %1099 = vmatpush1.msra.mxu0 %v86
    %1100 = vmatprep.subr.mxu0 %v91
    %1101 = vmatpush1.msra.mxu0 %v90
    %1102 = vmatprep.subr.mxu0 %v95
    %1103 = vmatpush1.msra.mxu0 %v94
    %1104 = vmatprep.subr.mxu0 %v99
    %1105 = vmatpush1.msra.mxu0 %v98
    %1106 = vmatprep.subr.mxu0 %v103
    %1107 = vmatpush1.msra.mxu0 %v102
    %1108 = vmatprep.subr.mxu0 %v107
    %1109 = vmatpush1.msra.mxu0 %v106
    %1110 = vmatprep.subr.mxu0 %v111
    %1111 = vmatpush1.msra.mxu0 %v110
    %1112 = vmatprep.subr.mxu0 %v115
    %1113 = vmatpush1.msra.mxu0 %v114
    %1114 = vmatprep.subr.mxu0 %v119
    %1115 = vmatpush1.msra.mxu0 %v118
    %1116 = vmatprep.subr.mxu0 %v123
    %1117 = vmatpush1.msra.mxu0 %v122
    %1118 = vmatprep.subr.mxu0 %v127
    %1119 = vmatpush1.msra.mxu0 %v126
    %1120 = vmatprep.subr.mxu0 %v131
    %1121 = vmatpush1.msra.mxu0 %v130
    %1122 = vmatprep.subr.mxu0 %v135
    %1123 = vmatpush1.msra.mxu0 %v134
    %1124 = vmatprep.subr.mxu0 %v139
    %1125 = vmatpush1.msra.mxu0 %v138
    %1126 = vmatprep.subr.mxu0 %v143
    %1127 = vmatpush1.msra.mxu0 %v142
    %1128 = vmatprep.subr.mxu0 0.0
    %1129 = vmatpush1.msra.mxu0 0.0
    %1130 = vmatprep.subr.mxu0 0.0
    %1131 = vmatpush1.msra.mxu0 0.0
    %1132 = vmatprep.subr.mxu0 0.0
    %1133 = vmatpush1.msra.mxu0 0.0
    %1134 = vmatprep.subr.mxu0 0.0
    %1135 = vmatpush1.msra.mxu0 0.0
    %1136 = vmatprep.subr.mxu0 0.0
    %1137 = vmatpush1.msra.mxu0 0.0
    %1138 = vmatprep.subr.mxu0 0.0
    %1139 = vmatpush1.msra.mxu0 0.0
    %1140 = vmatprep.subr.mxu0 0.0
    %1141 = vmatpush1.msra.mxu0 0.0
    %1142 = vmatprep.subr.mxu0 0.0
    %1143 = vmatpush1.msra.mxu0 0.0
    %1144 = vmatprep.subr.mxu0 0.0
    %1145 = vmatpush1.msra.mxu0 0.0
    %1146 = vmatprep.subr.mxu0 0.0
    %1147 = vmatpush1.msra.mxu0 0.0
    %1148 = vmatprep.subr.mxu0 0.0
    %1149 = vmatpush1.msra.mxu0 0.0
    %1150 = vmatprep.subr.mxu0 0.0
    %1151 = vmatpush1.msra.mxu0 0.0
    %1152 = vmatprep.subr.mxu0 0.0
    %1153 = vmatpush1.msra.mxu0 0.0
    %1154 = vmatprep.subr.mxu0 0.0
    %1155 = vmatpush1.msra.mxu0 0.0
    %1156 = vmatprep.subr.mxu0 0.0
    %1157 = vmatpush1.msra.mxu0 0.0
    %1158 = vmatprep.subr.mxu0 0.0
    %1159 = vmatpush1.msra.mxu0 0.0
    %1160 = vmatprep.mubr.f32.mxu0 0.0
    %1161 = vmatmul.mubr.f32.gmra.mrb[0].mxu0 %v1019
    %v1162 = vpop.f32.mrb[0].mxu0
    %v1163 = vadd.f32 0.0, %v1162
    %v1164 = vpop.f32.mrb[0].mxu0
    %v1165 = vadd.f32 0.0, %v1164
    %1166 = vdwg.mxu0
    %v1167 = vadd.f32 %v1021, %v1092
    %v1168 = vadd.f32 %v1022, %v1094
    %v1169 = vadd.f32 %v1023, %v1163
    %v1170 = vadd.f32 %v1024, %v1165
    %v1171 = vxor.u32 %v1167, 2147483648
    %v1172 = vmul.f32 %v1171, 1.442695
    %v1173 = vpow.pop %v1172
    %v1174 = vadd.f32 %v1173, 1.0
    %v1175 = vrcp.pop %v1174
    %v1176 = vmul.f32 1.0, %v1175
    %v1177 = vxor.u32 %v1168, 2147483648
    %v1178 = vmul.f32 %v1177, 1.442695
    %v1179 = vpow.pop %v1178
    %v1180 = vadd.f32 %v1179, 1.0
    %v1181 = vrcp.pop %v1180
    %v1182 = vmul.f32 1.0, %v1181
    %v1183 = vtanh.pop %v1169
    %v1184 = vxor.u32 %v1170, 2147483648
    %v1185 = vmul.f32 %v1184, 1.442695
    %v1186 = vpow.pop %v1185
    %v1187 = vadd.f32 %v1186, 1.0
    %v1188 = vrcp.pop %v1187
    %v1189 = vmul.f32 1.0, %v1188
    %v1190 = vmul.f32 %v1182, %v1017
    %v1191 = vmul.f32 %v1176, %v1183
    %v1192 = vadd.f32 %v1190, %v1191
    %v1193 = vtanh.pop %v1192
    %v1194 = vmul.f32 %v1189, %v1193
    %s1195 = scalar_lea.vmem [#allocation2], 192
    %v1196 = vld [vmem:[%s1195] sm:$0xff]
    %v1197 = vld [vmem:[%s1195 + $0x8] sm:$0xff]
    %v1198 = vld [vmem:[%s1195 + $0x10] sm:$0xff]
    %v1199 = vld [vmem:[%s1195 + $0x18] sm:$0xff]
    %1200 = vmatprep.subr.mxu0 %v81
    %1201 = vmatpush1.msra.mxu0 %v80
    %1202 = vmatprep.subr.mxu0 %v85
    %1203 = vmatpush1.msra.mxu0 %v84
    %1204 = vmatprep.subr.mxu0 %v89
    %1205 = vmatpush1.msra.mxu0 %v88
    %1206 = vmatprep.subr.mxu0 %v93
    %1207 = vmatpush1.msra.mxu0 %v92
    %1208 = vmatprep.subr.mxu0 %v97
    %1209 = vmatpush1.msra.mxu0 %v96
    %1210 = vmatprep.subr.mxu0 %v101
    %1211 = vmatpush1.msra.mxu0 %v100
    %1212 = vmatprep.subr.mxu0 %v105
    %1213 = vmatpush1.msra.mxu0 %v104
    %1214 = vmatprep.subr.mxu0 %v109
    %1215 = vmatpush1.msra.mxu0 %v108
    %1216 = vmatprep.subr.mxu0 %v113
    %1217 = vmatpush1.msra.mxu0 %v112
    %1218 = vmatprep.subr.mxu0 %v117
    %1219 = vmatpush1.msra.mxu0 %v116
    %1220 = vmatprep.subr.mxu0 %v121
    %1221 = vmatpush1.msra.mxu0 %v120
    %1222 = vmatprep.subr.mxu0 %v125
    %1223 = vmatpush1.msra.mxu0 %v124
    %1224 = vmatprep.subr.mxu0 %v129
    %1225 = vmatpush1.msra.mxu0 %v128
    %1226 = vmatprep.subr.mxu0 %v133
    %1227 = vmatpush1.msra.mxu0 %v132
    %1228 = vmatprep.subr.mxu0 %v137
    %1229 = vmatpush1.msra.mxu0 %v136
    %1230 = vmatprep.subr.mxu0 %v141
    %1231 = vmatpush1.msra.mxu0 %v140
    %1232 = vmatprep.subr.mxu0 0.0
    %1233 = vmatpush1.msra.mxu0 0.0
    %1234 = vmatprep.subr.mxu0 0.0
    %1235 = vmatpush1.msra.mxu0 0.0
    %1236 = vmatprep.subr.mxu0 0.0
    %1237 = vmatpush1.msra.mxu0 0.0
    %1238 = vmatprep.subr.mxu0 0.0
    %1239 = vmatpush1.msra.mxu0 0.0
    %1240 = vmatprep.subr.mxu0 0.0
    %1241 = vmatpush1.msra.mxu0 0.0
    %1242 = vmatprep.subr.mxu0 0.0
    %1243 = vmatpush1.msra.mxu0 0.0
    %1244 = vmatprep.subr.mxu0 0.0
    %1245 = vmatpush1.msra.mxu0 0.0
    %1246 = vmatprep.subr.mxu0 0.0
    %1247 = vmatpush1.msra.mxu0 0.0
    %1248 = vmatprep.subr.mxu0 0.0
    %1249 = vmatpush1.msra.mxu0 0.0
    %1250 = vmatprep.subr.mxu0 0.0
    %1251 = vmatpush1.msra.mxu0 0.0
    %1252 = vmatprep.subr.mxu0 0.0
    %1253 = vmatpush1.msra.mxu0 0.0
    %1254 = vmatprep.subr.mxu0 0.0
    %1255 = vmatpush1.msra.mxu0 0.0
    %1256 = vmatprep.subr.mxu0 0.0
    %1257 = vmatpush1.msra.mxu0 0.0
    %1258 = vmatprep.subr.mxu0 0.0
    %1259 = vmatpush1.msra.mxu0 0.0
    %1260 = vmatprep.subr.mxu0 0.0
    %1261 = vmatpush1.msra.mxu0 0.0
    %1262 = vmatprep.subr.mxu0 0.0
    %1263 = vmatpush1.msra.mxu0 0.0
    %1264 = vmatprep.mubr.f32.mxu0 0.0
    %1265 = vmatmul.mubr.f32.gmra.mrb[0].mxu0 %v1194
    %v1266 = vpop.f32.mrb[0].mxu0
    %v1267 = vadd.f32 0.0, %v1266
    %v1268 = vpop.f32.mrb[0].mxu0
    %v1269 = vadd.f32 0.0, %v1268
    %1270 = vdwg.mxu0
    %1271 = vmatprep.subr.mxu0 %v83
    %1272 = vmatpush1.msra.mxu0 %v82
    %1273 = vmatprep.subr.mxu0 %v87
    %1274 = vmatpush1.msra.mxu0 %v86
    %1275 = vmatprep.subr.mxu0 %v91
    %1276 = vmatpush1.msra.mxu0 %v90
    %1277 = vmatprep.subr.mxu0 %v95
    %1278 = vmatpush1.msra.mxu0 %v94
    %1279 = vmatprep.subr.mxu0 %v99
    %1280 = vmatpush1.msra.mxu0 %v98
    %1281 = vmatprep.subr.mxu0 %v103
    %1282 = vmatpush1.msra.mxu0 %v102
    %1283 = vmatprep.subr.mxu0 %v107
    %1284 = vmatpush1.msra.mxu0 %v106
    %1285 = vmatprep.subr.mxu0 %v111
    %1286 = vmatpush1.msra.mxu0 %v110
    %1287 = vmatprep.subr.mxu0 %v115
    %1288 = vmatpush1.msra.mxu0 %v114
    %1289 = vmatprep.subr.mxu0 %v119
    %1290 = vmatpush1.msra.mxu0 %v118
    %1291 = vmatprep.subr.mxu0 %v123
    %1292 = vmatpush1.msra.mxu0 %v122
    %1293 = vmatprep.subr.mxu0 %v127
    %1294 = vmatpush1.msra.mxu0 %v126
    %1295 = vmatprep.subr.mxu0 %v131
    %1296 = vmatpush1.msra.mxu0 %v130
    %1297 = vmatprep.subr.mxu0 %v135
    %1298 = vmatpush1.msra.mxu0 %v134
    %1299 = vmatprep.subr.mxu0 %v139
    %1300 = vmatpush1.msra.mxu0 %v138
    %1301 = vmatprep.subr.mxu0 %v143
    %1302 = vmatpush1.msra.mxu0 %v142
    %1303 = vmatprep.subr.mxu0 0.0
    %1304 = vmatpush1.msra.mxu0 0.0
    %1305 = vmatprep.subr.mxu0 0.0
    %1306 = vmatpush1.msra.mxu0 0.0
    %1307 = vmatprep.subr.mxu0 0.0
    %1308 = vmatpush1.msra.mxu0 0.0
    %1309 = vmatprep.subr.mxu0 0.0
    %1310 = vmatpush1.msra.mxu0 0.0
    %1311 = vmatprep.subr.mxu0 0.0
    %1312 = vmatpush1.msra.mxu0 0.0
    %1313 = vmatprep.subr.mxu0 0.0
    %1314 = vmatpush1.msra.mxu0 0.0
    %1315 = vmatprep.subr.mxu0 0.0
    %1316 = vmatpush1.msra.mxu0 0.0
    %1317 = vmatprep.subr.mxu0 0.0
    %1318 = vmatpush1.msra.mxu0 0.0
    %1319 = vmatprep.subr.mxu0 0.0
    %1320 = vmatpush1.msra.mxu0 0.0
    %1321 = vmatprep.subr.mxu0 0.0
    %1322 = vmatpush1.msra.mxu0 0.0
    %1323 = vmatprep.subr.mxu0 0.0
    %1324 = vmatpush1.msra.mxu0 0.0
    %1325 = vmatprep.subr.mxu0 0.0
    %1326 = vmatpush1.msra.mxu0 0.0
    %1327 = vmatprep.subr.mxu0 0.0
    %1328 = vmatpush1.msra.mxu0 0.0
    %1329 = vmatprep.subr.mxu0 0.0
    %1330 = vmatpush1.msra.mxu0 0.0
    %1331 = vmatprep.subr.mxu0 0.0
    %1332 = vmatpush1.msra.mxu0 0.0
    %1333 = vmatprep.subr.mxu0 0.0
    %1334 = vmatpush1.msra.mxu0 0.0
    %1335 = vmatprep.mubr.f32.mxu0 0.0
    %1336 = vmatmul.mubr.f32.gmra.mrb[0].mxu0 %v1194
    %v1337 = vpop.f32.mrb[0].mxu0
    %v1338 = vadd.f32 0.0, %v1337
    %v1339 = vpop.f32.mrb[0].mxu0
    %v1340 = vadd.f32 0.0, %v1339
    %1341 = vdwg.mxu0
    %v1342 = vadd.f32 %v1196, %v1267
    %v1343 = vadd.f32 %v1197, %v1269
    %v1344 = vadd.f32 %v1198, %v1338
    %v1345 = vadd.f32 %v1199, %v1340
    %v1346 = vxor.u32 %v1342, 2147483648
    %v1347 = vmul.f32 %v1346, 1.442695
    %v1348 = vpow.pop %v1347
    %v1349 = vadd.f32 %v1348, 1.0
    %v1350 = vrcp.pop %v1349
    %v1351 = vmul.f32 1.0, %v1350
    %v1352 = vxor.u32 %v1343, 2147483648
    %v1353 = vmul.f32 %v1352, 1.442695
    %v1354 = vpow.pop %v1353
    %v1355 = vadd.f32 %v1354, 1.0
    %v1356 = vrcp.pop %v1355
    %v1357 = vmul.f32 1.0, %v1356
    %v1358 = vtanh.pop %v1344
    %v1359 = vxor.u32 %v1345, 2147483648
    %v1360 = vmul.f32 %v1359, 1.442695
    %v1361 = vpow.pop %v1360
    %v1362 = vadd.f32 %v1361, 1.0
    %v1363 = vrcp.pop %v1362
    %v1364 = vmul.f32 1.0, %v1363
    %v1365 = vmul.f32 %v1357, %v1192
    %v1366 = vmul.f32 %v1351, %v1358
    %v1367 = vadd.f32 %v1365, %v1366
    %v1368 = vtanh.pop %v1367
    %v1369 = vmul.f32 %v1364, %v1368
    %s1370 = scalar_lea.vmem [#allocation2], 224
    %v1371 = vld [vmem:[%s1370] sm:$0xff]
    %v1372 = vld [vmem:[%s1370 + $0x8] sm:$0xff]
    %v1373 = vld [vmem:[%s1370 + $0x10] sm:$0xff]
    %v1374 = vld [vmem:[%s1370 + $0x18] sm:$0xff]
    %1375 = vmatprep.subr.mxu0 %v81
    %1376 = vmatpush1.msra.mxu0 %v80
    %1377 = vmatprep.subr.mxu0 %v85
    %1378 = vmatpush1.msra.mxu0 %v84
    %1379 = vmatprep.subr.mxu0 %v89
    %1380 = vmatpush1.msra.mxu0 %v88
    %1381 = vmatprep.subr.mxu0 %v93
    %1382 = vmatpush1.msra.mxu0 %v92
    %1383 = vmatprep.subr.mxu0 %v97
    %1384 = vmatpush1.msra.mxu0 %v96
    %1385 = vmatprep.subr.mxu0 %v101
    %1386 = vmatpush1.msra.mxu0 %v100
    %1387 = vmatprep.subr.mxu0 %v105
    %1388 = vmatpush1.msra.mxu0 %v104
    %1389 = vmatprep.subr.mxu0 %v109
    %1390 = vmatpush1.msra.mxu0 %v108
    %1391 = vmatprep.subr.mxu0 %v113
    %1392 = vmatpush1.msra.mxu0 %v112
    %1393 = vmatprep.subr.mxu0 %v117
    %1394 = vmatpush1.msra.mxu0 %v116
    %1395 = vmatprep.subr.mxu0 %v121
    %1396 = vmatpush1.msra.mxu0 %v120
    %1397 = vmatprep.subr.mxu0 %v125
    %1398 = vmatpush1.msra.mxu0 %v124
    %1399 = vmatprep.subr.mxu0 %v129
    %1400 = vmatpush1.msra.mxu0 %v128
    %1401 = vmatprep.subr.mxu0 %v133
    %1402 = vmatpush1.msra.mxu0 %v132
    %1403 = vmatprep.subr.mxu0 %v137
    %1404 = vmatpush1.msra.mxu0 %v136
    %1405 = vmatprep.subr.mxu0 %v141
    %1406 = vmatpush1.msra.mxu0 %v140
    %1407 = vmatprep.subr.mxu0 0.0
    %1408 = vmatpush1.msra.mxu0 0.0
    %1409 = vmatprep.subr.mxu0 0.0
    %1410 = vmatpush1.msra.mxu0 0.0
    %1411 = vmatprep.subr.mxu0 0.0
    %1412 = vmatpush1.msra.mxu0 0.0
    %1413 = vmatprep.subr.mxu0 0.0
    %1414 = vmatpush1.msra.mxu0 0.0
    %1415 = vmatprep.subr.mxu0 0.0
    %1416 = vmatpush1.msra.mxu0 0.0
    %1417 = vmatprep.subr.mxu0 0.0
    %1418 = vmatpush1.msra.mxu0 0.0
    %1419 = vmatprep.subr.mxu0 0.0
    %1420 = vmatpush1.msra.mxu0 0.0
    %1421 = vmatprep.subr.mxu0 0.0
    %1422 = vmatpush1.msra.mxu0 0.0
    %1423 = vmatprep.subr.mxu0 0.0
    %1424 = vmatpush1.msra.mxu0 0.0
    %1425 = vmatprep.subr.mxu0 0.0
    %1426 = vmatpush1.msra.mxu0 0.0
    %1427 = vmatprep.subr.mxu0 0.0
    %1428 = vmatpush1.msra.mxu0 0.0
    %1429 = vmatprep.subr.mxu0 0.0
    %1430 = vmatpush1.msra.mxu0 0.0
    %1431 = vmatprep.subr.mxu0 0.0
    %1432 = vmatpush1.msra.mxu0 0.0
    %1433 = vmatprep.subr.mxu0 0.0
    %1434 = vmatpush1.msra.mxu0 0.0
    %1435 = vmatprep.subr.mxu0 0.0
    %1436 = vmatpush1.msra.mxu0 0.0
    %1437 = vmatprep.subr.mxu0 0.0
    %1438 = vmatpush1.msra.mxu0 0.0
    %1439 = vmatprep.mubr.f32.mxu0 0.0
    %1440 = vmatmul.mubr.f32.gmra.mrb[0].mxu0 %v1369
    %v1441 = vpop.f32.mrb[0].mxu0
    %v1442 = vadd.f32 0.0, %v1441
    %v1443 = vpop.f32.mrb[0].mxu0
    %v1444 = vadd.f32 0.0, %v1443
    %1445 = vdwg.mxu0
    %1446 = vmatprep.subr.mxu0 %v83
    %1447 = vmatpush1.msra.mxu0 %v82
    %1448 = vmatprep.subr.mxu0 %v87
    %1449 = vmatpush1.msra.mxu0 %v86
    %1450 = vmatprep.subr.mxu0 %v91
    %1451 = vmatpush1.msra.mxu0 %v90
    %1452 = vmatprep.subr.mxu0 %v95
    %1453 = vmatpush1.msra.mxu0 %v94
    %1454 = vmatprep.subr.mxu0 %v99
    %1455 = vmatpush1.msra.mxu0 %v98
    %1456 = vmatprep.subr.mxu0 %v103
    %1457 = vmatpush1.msra.mxu0 %v102
    %1458 = vmatprep.subr.mxu0 %v107
    %1459 = vmatpush1.msra.mxu0 %v106
    %1460 = vmatprep.subr.mxu0 %v111
    %1461 = vmatpush1.msra.mxu0 %v110
    %1462 = vmatprep.subr.mxu0 %v115
    %1463 = vmatpush1.msra.mxu0 %v114
    %1464 = vmatprep.subr.mxu0 %v119
    %1465 = vmatpush1.msra.mxu0 %v118
    %1466 = vmatprep.subr.mxu0 %v123
    %1467 = vmatpush1.msra.mxu0 %v122
    %1468 = vmatprep.subr.mxu0 %v127
    %1469 = vmatpush1.msra.mxu0 %v126
    %1470 = vmatprep.subr.mxu0 %v131
    %1471 = vmatpush1.msra.mxu0 %v130
    %1472 = vmatprep.subr.mxu0 %v135
    %1473 = vmatpush1.msra.mxu0 %v134
    %1474 = vmatprep.subr.mxu0 %v139
    %1475 = vmatpush1.msra.mxu0 %v138
    %1476 = vmatprep.subr.mxu0 %v143
    %1477 = vmatpush1.msra.mxu0 %v142
    %1478 = vmatprep.subr.mxu0 0.0
    %1479 = vmatpush1.msra.mxu0 0.0
    %1480 = vmatprep.subr.mxu0 0.0
    %1481 = vmatpush1.msra.mxu0 0.0
    %1482 = vmatprep.subr.mxu0 0.0
    %1483 = vmatpush1.msra.mxu0 0.0
    %1484 = vmatprep.subr.mxu0 0.0
    %1485 = vmatpush1.msra.mxu0 0.0
    %1486 = vmatprep.subr.mxu0 0.0
    %1487 = vmatpush1.msra.mxu0 0.0
    %1488 = vmatprep.subr.mxu0 0.0
    %1489 = vmatpush1.msra.mxu0 0.0
    %1490 = vmatprep.subr.mxu0 0.0
    %1491 = vmatpush1.msra.mxu0 0.0
    %1492 = vmatprep.subr.mxu0 0.0
    %1493 = vmatpush1.msra.mxu0 0.0
    %1494 = vmatprep.subr.mxu0 0.0
    %1495 = vmatpush1.msra.mxu0 0.0
    %1496 = vmatprep.subr.mxu0 0.0
    %1497 = vmatpush1.msra.mxu0 0.0
    %1498 = vmatprep.subr.mxu0 0.0
    %1499 = vmatpush1.msra.mxu0 0.0
    %1500 = vmatprep.subr.mxu0 0.0
    %1501 = vmatpush1.msra.mxu0 0.0
    %1502 = vmatprep.subr.mxu0 0.0
    %1503 = vmatpush1.msra.mxu0 0.0
    %1504 = vmatprep.subr.mxu0 0.0
    %1505 = vmatpush1.msra.mxu0 0.0
    %1506 = vmatprep.subr.mxu0 0.0
    %1507 = vmatpush1.msra.mxu0 0.0
    %1508 = vmatprep.subr.mxu0 0.0
    %1509 = vmatpush1.msra.mxu0 0.0
    %1510 = vmatprep.mubr.f32.mxu0 0.0
    %1511 = vmatmul.mubr.f32.gmra.mrb[0].mxu0 %v1369
    %v1512 = vpop.f32.mrb[0].mxu0
    %v1513 = vadd.f32 0.0, %v1512
    %v1514 = vpop.f32.mrb[0].mxu0
    %v1515 = vadd.f32 0.0, %v1514
    %1516 = vdwg.mxu0
    %v1517 = vadd.f32 %v1371, %v1442
    %v1518 = vadd.f32 %v1372, %v1444
    %v1519 = vadd.f32 %v1373, %v1513
    %v1520 = vadd.f32 %v1374, %v1515
    %v1521 = vxor.u32 %v1517, 2147483648
    %v1522 = vmul.f32 %v1521, 1.442695
    %v1523 = vpow.pop %v1522
    %v1524 = vadd.f32 %v1523, 1.0
    %v1525 = vrcp.pop %v1524
    %v1526 = vmul.f32 1.0, %v1525
    %v1527 = vxor.u32 %v1518, 2147483648
    %v1528 = vmul.f32 %v1527, 1.442695
    %v1529 = vpow.pop %v1528
    %v1530 = vadd.f32 %v1529, 1.0
    %v1531 = vrcp.pop %v1530
    %v1532 = vmul.f32 1.0, %v1531
    %v1533 = vtanh.pop %v1519
    %v1534 = vxor.u32 %v1520, 2147483648
    %v1535 = vmul.f32 %v1534, 1.442695
    %v1536 = vpow.pop %v1535
    %v1537 = vadd.f32 %v1536, 1.0
    %v1538 = vrcp.pop %v1537
    %v1539 = vmul.f32 1.0, %v1538
    %v1540 = vmul.f32 %v1532, %v1367
    %v1541 = vmul.f32 %v1526, %v1533
    %v1542 = vadd.f32 %v1540, %v1541
    %v1543 = vtanh.pop %v1542
    %v1544 = vmul.f32 %v1539, %v1543
    %1545 = vst [vmem:[#allocation10] sm:$0xff] %v1544
    %1546 = vst [vmem:[#allocation11] sm:$0xff] %v1542
    // Predicated region
    $region38: #{tpu_custom_call.1} parent=1 // pred_check
      _
    $region39: #{tpu_custom_call.1} parent=1 // pred_check_branch
      %1548 = sbr.rel (0) target = $region41
    $region40: #{tpu_custom_call.1} parent=1 // pred_region
      %s1550 = ssub.s32 128, 128
      %1551 = vsyncadd [#allocation4], %s1550
      %s1553 = sshll.u32 [#allocation10], 4
      %s1554 = int_to_ptr.vmem [resolvable:$true] %s1553
      %1556 = dma.vmem_to_hbm [thread:$0]  %s1554, 128, %s4, [#allocation4]
    $region41: #{tpu_custom_call.1} parent=1 // pred_fallthru
      _
    // Predicated region
    $region42: #{tpu_custom_call.1} parent=1 // pred_check
      _
    $region43: #{tpu_custom_call.1} parent=1 // pred_check_branch
      %1558 = sbr.rel (0) target = $region45
    $region44: #{tpu_custom_call.1} parent=1 // pred_region
      %s1560 = ssub.s32 128, 128
      %1561 = vsyncadd [#allocation12], %s1560
      %s1563 = sshll.u32 [#allocation11], 4
      %s1564 = int_to_ptr.vmem [resolvable:$true] %s1563
      %1566 = dma.vmem_to_hbm [thread:$0]  %s1564, 128, %s5, [#allocation12]
    $region45: #{tpu_custom_call.1} parent=1 // pred_fallthru
      _
    // Predicated region
    $region46: #{tpu_custom_call.1} parent=1 // pred_check
      _
    $region47: #{tpu_custom_call.1} parent=1 // pred_check_branch
      %1568 = sbr.rel (0) target = $region49
    $region48: #{tpu_custom_call.1} parent=1 // pred_region
      %1569 = dma.done [#allocation4], 128
    $region49: #{tpu_custom_call.1} parent=1 // pred_fallthru
      _
    // Predicated region
    $region50: #{tpu_custom_call.1} parent=1 // pred_check
      _
    $region51: #{tpu_custom_call.1} parent=1 // pred_check_branch
      %1571 = sbr.rel (0) target = $region53
    $region52: #{tpu_custom_call.1} parent=1 // pred_region
      %1572 = dma.done [#allocation12], 128
    $region53: #{tpu_custom_call.1} parent=1 // pred_fallthru
      _
    %1573 = vsyncpa [#allocation3], 1
    %1574 = vsyncpa [#allocation6], 1
    %1575 = vsyncpa [#allocation9], 1
    %1576 = vsyncpa [#allocation4], 1
    %1577 = vsyncpa [#allocation12], 1

</llo_original>
